<compile_context>
chip_gen: v7x
topology: tpu7x:2x2x1
jax: 0.10.0
libtpu: 0.0.40
codegen_flags: <defaults>
</compile_context>

<pallas_src>
import math
import functools

import jax
import jax.numpy as jnp
from jax.experimental import pallas as pl
from jax.experimental.pallas import tpu as pltpu


def _cross_attn_kernel(*refs, nhead, has_pe, has_mask, need_weights):
    """One grid step = `bt` batch elements of the full cross-attention layer."""
    i = 0
    q_ref = refs[i]; i += 1
    pe_ref = None
    if has_pe:
        pe_ref = refs[i]; i += 1
    src_ref = refs[i]; i += 1
    mask_ref = None
    if has_mask:
        mask_ref = refs[i]; i += 1
    wq_ref, wkv_ref, wo_ref, b_ref = refs[i:i + 4]
    i += 4
    out_ref = refs[i]; i += 1
    attnw_ref = refs[i] if need_weights else None

    bt, n_q, d_model = q_ref.shape
    n_p = src_ref.shape[1]
    head_dim = d_model // nhead

    # query (+ positional embedding); keep an f32 copy for the residual add.
    q_f = q_ref[...].astype(jnp.float32)
    if has_pe:
        q_f = q_f + pe_ref[...].astype(jnp.float32)
    q_flat = q_f.reshape(bt * n_q, d_model)              # leading-dim merge: free
    src_flat = src_ref[...].reshape(bt * n_p, d_model)   # bf16, straight to MXU

    bias = b_ref[...]                                    # (1, 4*d) f32, packed
    bq = bias[:, 0:d_model]                              # 1/sqrt(hd) pre-folded
    bkv = bias[:, d_model:3 * d_model]
    bo = bias[:, 3 * d_model:4 * d_model]

    # Projections: bf16 MXU operands, f32 accumulation, f32 bias add.
    # Wq arrives pre-scaled by 1/sqrt(head_dim); wkv is [Wk^T | Wv^T] fused.
    Q = jnp.dot(q_flat.astype(jnp.bfloat16), wq_ref[...],
                preferred_element_type=jnp.float32) + bq
    KV = jnp.dot(src_flat, wkv_ref[...],
                 preferred_element_type=jnp.float32) + bkv

    Qh = Q.astype(jnp.bfloat16).reshape(bt, n_q, d_model)
    Kb = KV[:, 0:d_model].astype(jnp.bfloat16).reshape(bt, n_p, d_model)
    Vb = KV[:, d_model:2 * d_model].astype(jnp.bfloat16).reshape(bt, n_p, d_model)

    mask = mask_ref[...].astype(jnp.float32) if has_mask else None

    o_heads = []
    attn_sum = jnp.zeros((bt, n_q, n_p), jnp.float32) if need_weights else None
    for h in range(nhead):                      # static unroll; nhead is small
        lo = h * head_dim
        hi = lo + head_dim
        # Batched (over bt) per-head scores; softmax math stays in f32.
        s = jnp.einsum("bqd,bkd->bqk", Qh[:, :, lo:hi], Kb[:, :, lo:hi],
                       preferred_element_type=jnp.float32)
        if has_mask:
            s = s + mask
        s = s - jnp.max(s, axis=-1, keepdims=True)
        p = jnp.exp(s)
        # Exact normalization so the returned attention weights sum to 1.
        p = p / jnp.sum(p, axis=-1, keepdims=True)
        if need_weights:
            attn_sum = attn_sum + p
        o_heads.append(jnp.einsum("bqk,bkd->bqd", p.astype(jnp.bfloat16),
                                  Vb[:, :, lo:hi],
                                  preferred_element_type=jnp.float32))

    # Head-concatenated slab -> ONE output projection with K = d_model.
    o_cat = jnp.concatenate(o_heads, axis=-1).reshape(bt * n_q, d_model)
    attn_out = jnp.dot(o_cat.astype(jnp.bfloat16), wo_ref[...],
                       preferred_element_type=jnp.float32) + bo

    # dropout(p=0) and LayerNorm results are discarded by the reference module,
    # so they do not affect the returned tensors.
    out_ref[...] = (attn_out + q_flat).reshape(bt, n_q, d_model).astype(out_ref.dtype)
    if need_weights:
        attnw_ref[...] = (attn_sum * (1.0 / nhead)).astype(attnw_ref.dtype)


def _vmem_capacity_bytes():
    try:
        cap = getattr(pltpu.get_tpu_info(), "vmem_capacity_bytes", None)
        if cap:
            return int(cap)
    except Exception:
        pass
    return 128 * 2**20        # v5e / v6e default


def _per_step_bytes(bt, n_q, n_p, d_model, has_pe, has_mask, need_weights):
    """Rough VMEM bytes for one grid step (pipelined I/O blocks double-buffered;
    in-kernel temporaries counted once)."""
    io = ((1 + int(has_pe)) * n_q * d_model * 2      # bf16 query (+ pe)
          + n_p * d_model * 2                        # bf16 source
          + int(has_mask) * n_q * n_p * 2            # bf16 additive mask
          + n_q * d_model * 4                        # output
          + int(need_weights) * n_q * n_p * 4)       # averaged attn weights
    live = (n_q * d_model * 24                       # q_f32 / Q / Qh / o_cat / out
            + n_p * d_model * 12                     # KV f32 + K/V bf16 copies
            + n_q * n_p * (12 + 4 * int(need_weights) + 4 * int(has_mask)))
    return bt * (2 * io + live)


def _weight_bytes(d_model):
    # wq + wkv + wo in bf16 + packed f32 bias, double-buffered by the pipeline.
    return 2 * (4 * d_model * d_model * 2 + 4 * d_model * 4)


def _pick_batch_tile(B, n_q, n_p, d_model, has_pe, has_mask, need_weights,
                     budget):
    # Keep >= 2 grid steps so a 2-TensorCore part (v7x) gets both cores busy;
    # the extra step costs only ~0.35us on single-core parts.
    max_bt = B if B == 1 else B // 2
    for bt in range(max_bt, 0, -1):
        if B % bt == 0 and _per_step_bytes(
                bt, n_q, n_p, d_model, has_pe, has_mask, need_weights) <= budget:
            return bt
    return 1


def cross_attention_layer(source, query, attn_mask=None, pe=None, *,
                          params, nhead, need_weights=True):
    """source (B, n_p, d), query (B, n_q, d), attn_mask (B, n_q, n_p) additive
    float mask or None, pe (B, n_q, d) or None.  Returns (output, weights)
    (or just output when need_weights=False)."""
    B, n_q, d_model = query.shape
    n_p = source.shape[1]
    assert d_model % nhead == 0
    head_dim = d_model // nhead
    scale = 1.0 / math.sqrt(head_dim)

    out_dtype = query.dtype
    has_pe = pe is not None
    has_mask = attn_mask is not None

    # HBM-bound activation streams go in bf16 (they are MXU operands anyway).
    query_bf = query.astype(jnp.bfloat16)
    source_bf = source.astype(jnp.bfloat16)
    pe_bf = pe.astype(jnp.bfloat16) if has_pe else None
    mask_bf = attn_mask.astype(jnp.bfloat16) if has_mask else None

    # Pre-transposed (d_in, d_out) bf16 weights; 1/sqrt(head_dim) folded into
    # Wq/bq; K and V projection weights fused into one (d, 2d) matrix; all
    # biases packed into a single (1, 4d) f32 block.
    wq = (params["wq"].T * scale).astype(jnp.bfloat16)
    wkv = jnp.concatenate([params["wk"].T, params["wv"].T],
                          axis=1).astype(jnp.bfloat16)
    wo = params["wo"].T.astype(jnp.bfloat16)
    bias = jnp.concatenate(
        [params["bq"].reshape(1, d_model) * scale,
         params["bk"].reshape(1, d_model),
         params["bv"].reshape(1, d_model),
         params["bo"].reshape(1, d_model)], axis=1).astype(jnp.float32)

    vmem_cap = _vmem_capacity_bytes()
    small_vmem = vmem_cap <= 64 * 2**20            # v7x-class part (64 MiB)
    act_budget = (9 if small_vmem else 28) * 2**20
    limit_cap = (40 if small_vmem else 48) * 2**20

    bt = _pick_batch_tile(B, n_q, n_p, d_model, has_pe, has_mask,
                          need_weights, act_budget)
    grid = (B // bt,)

    q_spec = pl.BlockSpec((bt, n_q, d_model), lambda b: (b, 0, 0))
    src_spec = pl.BlockSpec((bt, n_p, d_model), lambda b: (b, 0, 0))
    mask_spec = pl.BlockSpec((bt, n_q, n_p), lambda b: (b, 0, 0))
    # Constant index maps: the pipeline DMAs the weight/bias blocks once and
    # skips the copy on every later grid step.
    wq_spec = pl.BlockSpec((d_model, d_model), lambda b: (0, 0))
    wkv_spec = pl.BlockSpec((d_model, 2 * d_model), lambda b: (0, 0))
    wo_spec = pl.BlockSpec((d_model, d_model), lambda b: (0, 0))
    b_spec = pl.BlockSpec((1, 4 * d_model), lambda b: (0, 0))

    inputs, in_specs = [query_bf], [q_spec]
    if has_pe:
        inputs.append(pe_bf)
        in_specs.append(q_spec)
    inputs.append(source_bf)
    in_specs.append(src_spec)
    if has_mask:
        inputs.append(mask_bf)
        in_specs.append(mask_spec)
    inputs += [wq, wkv, wo, bias]
    in_specs += [wq_spec, wkv_spec, wo_spec, b_spec]

    out_spec = pl.BlockSpec((bt, n_q, d_model), lambda b: (b, 0, 0))
    out_sds = jax.ShapeDtypeStruct((B, n_q, d_model), out_dtype)
    if need_weights:
        # TODO(synk): pad n_p to a multiple of 128 for lane-dense mask/weights
        # blocks when the caller's n_p is not already 128-aligned.
        out_shape = (out_sds, jax.ShapeDtypeStruct((B, n_q, n_p), jnp.float32))
        out_specs = [out_spec,
                     pl.BlockSpec((bt, n_q, n_p), lambda b: (b, 0, 0))]
    else:
        out_shape = out_sds
        out_specs = out_spec

    per_step = _per_step_bytes(bt, n_q, n_p, d_model, has_pe, has_mask,
                               need_weights)
    vmem_limit = int(min(max(2 * per_step + _weight_bytes(d_model) + (4 << 20),
                             16 * 2**20),
                         limit_cap))

    kernel = functools.partial(_cross_attn_kernel, nhead=nhead, has_pe=has_pe,
                               has_mask=has_mask, need_weights=need_weights)

    result = pl.pallas_call(
        kernel,
        out_shape=out_shape,
        grid_spec=pltpu.PrefetchScalarGridSpec(
            num_scalar_prefetch=0,
            grid=grid,
            in_specs=in_specs,
            out_specs=out_specs,
        ),
        compiler_params=pltpu.CompilerParams(
            dimension_semantics=("parallel",),
            vmem_limit_bytes=vmem_limit,
        ),
    )(*inputs)

    if need_weights:
        out, attn_w = result
        return out, attn_w
    return result


def _xavier_uniform(key, shape):
    fan_out, fan_in = shape
    bound = math.sqrt(6.0 / (fan_in + fan_out))
    return jax.random.uniform(key, shape, jnp.float32, -bound, bound)


def init_params(key, d_model):
    ks = jax.random.split(key, 4)
    # Biases are initialized to 0 by nn.MultiheadAttention and are not touched
    # by the module's xavier re-init (dim <= 1).
    return {
        "wq": _xavier_uniform(ks[0], (d_model, d_model)),
        "wk": _xavier_uniform(ks[1], (d_model, d_model)),
        "wv": _xavier_uniform(ks[2], (d_model, d_model)),
        "wo": _xavier_uniform(ks[3], (d_model, d_model)),
        "bq": jnp.zeros((1, d_model), jnp.float32),
        "bk": jnp.zeros((1, d_model), jnp.float32),
        "bv": jnp.zeros((1, d_model), jnp.float32),
        "bo": jnp.zeros((1, d_model), jnp.float32),
    }


def _reference(source, query, attn_mask, pe, params, nhead):
    """Pure-JAX f32 reference of the PyTorch forward (for a sanity check)."""
    B, n_q, d = query.shape
    n_p = source.shape[1]
    hd = d // nhead
    q_in = query + (0.0 if pe is None else pe)
    Q = q_in @ params["wq"].T + params["bq"]
    K = source @ params["wk"].T + params["bk"]
    V = source @ params["wv"].T + params["bv"]
    Qh = Q.reshape(B, n_q, nhead, hd).transpose(0, 2, 1, 3)
    Kh = K.reshape(B, n_p, nhead, hd).transpose(0, 2, 1, 3)
    Vh = V.reshape(B, n_p, nhead, hd).transpose(0, 2, 1, 3)
    s = jnp.einsum("bhqd,bhkd->bhqk", Qh, Kh) / math.sqrt(hd)
    if attn_mask is not None:
        s = s + attn_mask[:, None, :, :]
    p = jax.nn.softmax(s, axis=-1)
    o = jnp.einsum("bhqk,bhkd->bhqd", p, Vh).transpose(0, 2, 1, 3).reshape(B, n_q, d)
    o = o @ params["wo"].T + params["bo"]
    return o + q_in, p.mean(axis=1)


if __name__ == "__main__":
    B, n_q, n_p = 2, 8, 16
    d_model, nhead = 32, 4

    root = jax.random.PRNGKey(0)
    k_src, k_qry, k_pe, k_mask, k_par = jax.random.split(root, 5)

    source = jax.random.normal(k_src, (B, n_p, d_model), jnp.float32)
    query = jax.random.normal(k_qry, (B, n_q, d_model), jnp.float32)
    pe = jax.random.normal(k_pe, (B, n_q, d_model), jnp.float32)
    # Additive float attention mask (same mask replicated per head, as the
    # module does with .unsqueeze(1).repeat(1, nhead, 1, 1)).
    attn_mask = jnp.where(
        jax.random.uniform(k_mask, (B, n_q, n_p)) < 0.2, -1e9, 0.0
    ).astype(jnp.float32)

    params = init_params(k_par, d_model)

    out, attn_w = cross_attention_layer(
        source, query, attn_mask=attn_mask, pe=pe, params=params, nhead=nhead)
    jax.block_until_ready((out, attn_w))

    # Tolerances account for the bf16 MXU path and bf16 activation streams
    # (the reference is pure f32).
    ref_out, ref_w = _reference(source, query, attn_mask, pe, params, nhead)
    assert jnp.allclose(out, ref_out, atol=6e-2, rtol=6e-2)
    assert jnp.allclose(attn_w, ref_w, atol=3e-2, rtol=3e-2)

    print("KERNEL_OK")
</pallas_src>

<mosaic_0001>
module attributes {stable_mosaic.version = 11 : i64} {
  func.func @_cross_attn_kernel(%arg0: i32, %arg1: memref<1x8x32xbf16, #tpu.memory_space<vmem>>, %arg2: memref<1x8x32xbf16, #tpu.memory_space<vmem>>, %arg3: memref<1x16x32xbf16, #tpu.memory_space<vmem>>, %arg4: memref<1x8x16xbf16, #tpu.memory_space<vmem>>, %arg5: memref<32x32xbf16, #tpu.memory_space<vmem>>, %arg6: memref<32x64xbf16, #tpu.memory_space<vmem>>, %arg7: memref<32x32xbf16, #tpu.memory_space<vmem>>, %arg8: memref<1x128xf32, #tpu.memory_space<vmem>>, %arg9: memref<1x8x32xf32, #tpu.memory_space<vmem>>, %arg10: memref<1x8x16xf32, #tpu.memory_space<vmem>>) attributes {dimension_semantics = [#tpu.dimension_semantics<parallel>], iteration_bounds = array<i64: 2>, scalar_prefetch = 0 : i64, scratch_operands = 0 : i64, tpu.core_type = #tpu.core_type<tc>, window_params = [{transform_indices = @transform_0, window_bounds = array<i64: 1, 8, 32>}, {transform_indices = @transform_1, window_bounds = array<i64: 1, 8, 32>}, {transform_indices = @transform_2, window_bounds = array<i64: 1, 16, 32>}, {transform_indices = @transform_3, window_bounds = array<i64: 1, 8, 16>}, {pipeline_mode = #tpu.pipeline_mode<synchronous>, transform_indices = @transform_4, window_bounds = array<i64: 32, 32>}, {pipeline_mode = #tpu.pipeline_mode<synchronous>, transform_indices = @transform_5, window_bounds = array<i64: 32, 64>}, {pipeline_mode = #tpu.pipeline_mode<synchronous>, transform_indices = @transform_6, window_bounds = array<i64: 32, 32>}, {pipeline_mode = #tpu.pipeline_mode<synchronous>, transform_indices = @transform_7, window_bounds = array<i64: 1, 128>}, {transform_indices = @transform_8, window_bounds = array<i64: 1, 8, 32>}, {transform_indices = @transform_9, window_bounds = array<i64: 1, 8, 16>}]} {
    %c0 = arith.constant 0 : index
    %c0_0 = arith.constant 0 : index
    %c0_1 = arith.constant 0 : index
    %0 = vector.load %arg1[%c0, %c0_0, %c0_1] : memref<1x8x32xbf16, #tpu.memory_space<vmem>>, vector<1x8x32xbf16>
    %1 = arith.extf %0 : vector<1x8x32xbf16> to vector<1x8x32xf32>
    %c0_2 = arith.constant 0 : index
    %c0_3 = arith.constant 0 : index
    %c0_4 = arith.constant 0 : index
    %2 = vector.load %arg2[%c0_2, %c0_3, %c0_4] : memref<1x8x32xbf16, #tpu.memory_space<vmem>>, vector<1x8x32xbf16>
    %3 = arith.extf %2 : vector<1x8x32xbf16> to vector<1x8x32xf32>
    %4 = arith.addf %1, %3 : vector<1x8x32xf32>
    %5 = vector.shape_cast %4 : vector<1x8x32xf32> to vector<8x32xf32>
    %c0_5 = arith.constant 0 : index
    %c0_6 = arith.constant 0 : index
    %c0_7 = arith.constant 0 : index
    %6 = vector.load %arg3[%c0_5, %c0_6, %c0_7] : memref<1x16x32xbf16, #tpu.memory_space<vmem>>, vector<1x16x32xbf16>
    %7 = vector.shape_cast %6 : vector<1x16x32xbf16> to vector<16x32xbf16>
    %c0_8 = arith.constant 0 : index
    %c0_9 = arith.constant 0 : index
    %8 = vector.load %arg8[%c0_8, %c0_9] : memref<1x128xf32, #tpu.memory_space<vmem>>, vector<1x128xf32>
    %9 = vector.extract_strided_slice %8 {offsets = [0, 0], sizes = [1, 32], strides = [1, 1]} : vector<1x128xf32> to vector<1x32xf32>
    %10 = vector.extract_strided_slice %8 {offsets = [0, 32], sizes = [1, 64], strides = [1, 1]} : vector<1x128xf32> to vector<1x64xf32>
    %11 = vector.extract_strided_slice %8 {offsets = [0, 96], sizes = [1, 32], strides = [1, 1]} : vector<1x128xf32> to vector<1x32xf32>
    %12 = arith.truncf %5 : vector<8x32xf32> to vector<8x32xbf16>
    %c0_10 = arith.constant 0 : index
    %c0_11 = arith.constant 0 : index
    %13 = vector.load %arg5[%c0_10, %c0_11] : memref<32x32xbf16, #tpu.memory_space<vmem>>, vector<32x32xbf16>
    %cst = arith.constant dense<0.000000e+00> : vector<8x32xf32>
    %14 = tpu.matmul %12, %13, %cst {dimension_numbers = #tpu.dot_dimension_numbers<[1], [0], [0], [1], [0, 0, 1, 1], [], []>} : vector<8x32xbf16>, vector<32x32xbf16>, vector<8x32xf32> -> vector<8x32xf32>
    %15 = vector.broadcast %9 : vector<1x32xf32> to vector<8x32xf32>
    %16 = arith.addf %14, %15 : vector<8x32xf32>
    %c0_12 = arith.constant 0 : index
    %c0_13 = arith.constant 0 : index
    %17 = vector.load %arg6[%c0_12, %c0_13] : memref<32x64xbf16, #tpu.memory_space<vmem>>, vector<32x64xbf16>
    %cst_14 = arith.constant dense<0.000000e+00> : vector<16x64xf32>
    %18 = tpu.matmul %7, %17, %cst_14 {dimension_numbers = #tpu.dot_dimension_numbers<[1], [0], [0], [1], [0, 0, 1, 1], [], []>} : vector<16x32xbf16>, vector<32x64xbf16>, vector<16x64xf32> -> vector<16x64xf32>
    %19 = vector.broadcast %10 : vector<1x64xf32> to vector<16x64xf32>
    %20 = arith.addf %18, %19 : vector<16x64xf32>
    %21 = arith.truncf %16 : vector<8x32xf32> to vector<8x32xbf16>
    %22 = vector.shape_cast %21 : vector<8x32xbf16> to vector<1x8x32xbf16>
    %23 = vector.extract_strided_slice %20 {offsets = [0, 0], sizes = [16, 32], strides = [1, 1]} : vector<16x64xf32> to vector<16x32xf32>
    %24 = arith.truncf %23 : vector<16x32xf32> to vector<16x32xbf16>
    %25 = vector.shape_cast %24 : vector<16x32xbf16> to vector<1x16x32xbf16>
    %26 = vector.extract_strided_slice %20 {offsets = [0, 32], sizes = [16, 32], strides = [1, 1]} : vector<16x64xf32> to vector<16x32xf32>
    %27 = arith.truncf %26 : vector<16x32xf32> to vector<16x32xbf16>
    %28 = vector.shape_cast %27 : vector<16x32xbf16> to vector<1x16x32xbf16>
    %c0_15 = arith.constant 0 : index
    %c0_16 = arith.constant 0 : index
    %c0_17 = arith.constant 0 : index
    %29 = vector.load %arg4[%c0_15, %c0_16, %c0_17] : memref<1x8x16xbf16, #tpu.memory_space<vmem>>, vector<1x8x16xbf16>
    %30 = arith.extf %29 : vector<1x8x16xbf16> to vector<1x8x16xf32>
    %cst_18 = arith.constant 0.000000e+00 : f32
    %31 = vector.broadcast %cst_18 : f32 to vector<1x8x16xf32>
    %32 = vector.extract_strided_slice %22 {offsets = [0, 0, 0], sizes = [1, 8, 8], strides = [1, 1, 1]} : vector<1x8x32xbf16> to vector<1x8x8xbf16>
    %33 = vector.extract_strided_slice %25 {offsets = [0, 0, 0], sizes = [1, 16, 8], strides = [1, 1, 1]} : vector<1x16x32xbf16> to vector<1x16x8xbf16>
    "tpu.trace_start"() <{level = 10 : i32, message = "bqd,bkd->bqk"}> : () -> ()
    %cst_19 = arith.constant dense<0.000000e+00> : vector<1x8x16xf32>
    %34 = tpu.matmul %32, %33, %cst_19 {dimension_numbers = #tpu.dot_dimension_numbers<[2], [2], [1], [1], [0, 0, 0, 1, 1, 1], [0], [0]>} : vector<1x8x8xbf16>, vector<1x16x8xbf16>, vector<1x8x16xf32> -> vector<1x8x16xf32>
    "tpu.trace_stop"() : () -> ()
    %35 = arith.addf %34, %30 : vector<1x8x16xf32>
    %cst_20 = arith.constant dense<0xFF800000> : vector<1x8xf32>
    %36 = vector.multi_reduction <maximumf>, %35, %cst_20 [2] : vector<1x8x16xf32> to vector<1x8xf32>
    %37 = vector.shape_cast %36 : vector<1x8xf32> to vector<1x8x1xf32>
    %38 = vector.broadcast %37 : vector<1x8x1xf32> to vector<1x8x16xf32>
    %39 = arith.subf %35, %38 : vector<1x8x16xf32>
    %40 = math.exp %39 : vector<1x8x16xf32>
    %cst_21 = arith.constant dense<0.000000e+00> : vector<1x8xf32>
    %41 = vector.multi_reduction <add>, %40, %cst_21 [2] : vector<1x8x16xf32> to vector<1x8xf32>
    %42 = vector.shape_cast %41 : vector<1x8xf32> to vector<1x8x1xf32>
    %43 = vector.broadcast %42 : vector<1x8x1xf32> to vector<1x8x16xf32>
    %44 = arith.divf %40, %43 : vector<1x8x16xf32>
    %45 = arith.addf %31, %44 : vector<1x8x16xf32>
    %46 = arith.truncf %44 : vector<1x8x16xf32> to vector<1x8x16xbf16>
    %47 = vector.extract_strided_slice %28 {offsets = [0, 0, 0], sizes = [1, 16, 8], strides = [1, 1, 1]} : vector<1x16x32xbf16> to vector<1x16x8xbf16>
    "tpu.trace_start"() <{level = 10 : i32, message = "bqk,bkd->bqd"}> : () -> ()
    %cst_22 = arith.constant dense<0.000000e+00> : vector<1x8x8xf32>
    %48 = tpu.matmul %46, %47, %cst_22 {dimension_numbers = #tpu.dot_dimension_numbers<[2], [1], [1], [2], [0, 0, 0, 1, 1, 2], [0], [0]>} : vector<1x8x16xbf16>, vector<1x16x8xbf16>, vector<1x8x8xf32> -> vector<1x8x8xf32>
    "tpu.trace_stop"() : () -> ()
    %49 = vector.extract_strided_slice %22 {offsets = [0, 0, 8], sizes = [1, 8, 8], strides = [1, 1, 1]} : vector<1x8x32xbf16> to vector<1x8x8xbf16>
    %50 = vector.extract_strided_slice %25 {offsets = [0, 0, 8], sizes = [1, 16, 8], strides = [1, 1, 1]} : vector<1x16x32xbf16> to vector<1x16x8xbf16>
    "tpu.trace_start"() <{level = 10 : i32, message = "bqd,bkd->bqk"}> : () -> ()
    %cst_23 = arith.constant dense<0.000000e+00> : vector<1x8x16xf32>
    %51 = tpu.matmul %49, %50, %cst_23 {dimension_numbers = #tpu.dot_dimension_numbers<[2], [2], [1], [1], [0, 0, 0, 1, 1, 1], [0], [0]>} : vector<1x8x8xbf16>, vector<1x16x8xbf16>, vector<1x8x16xf32> -> vector<1x8x16xf32>
    "tpu.trace_stop"() : () -> ()
    %52 = arith.addf %51, %30 : vector<1x8x16xf32>
    %cst_24 = arith.constant dense<0xFF800000> : vector<1x8xf32>
    %53 = vector.multi_reduction <maximumf>, %52, %cst_24 [2] : vector<1x8x16xf32> to vector<1x8xf32>
    %54 = vector.shape_cast %53 : vector<1x8xf32> to vector<1x8x1xf32>
    %55 = vector.broadcast %54 : vector<1x8x1xf32> to vector<1x8x16xf32>
    %56 = arith.subf %52, %55 : vector<1x8x16xf32>
    %57 = math.exp %56 : vector<1x8x16xf32>
    %cst_25 = arith.constant dense<0.000000e+00> : vector<1x8xf32>
    %58 = vector.multi_reduction <add>, %57, %cst_25 [2] : vector<1x8x16xf32> to vector<1x8xf32>
    %59 = vector.shape_cast %58 : vector<1x8xf32> to vector<1x8x1xf32>
    %60 = vector.broadcast %59 : vector<1x8x1xf32> to vector<1x8x16xf32>
    %61 = arith.divf %57, %60 : vector<1x8x16xf32>
    %62 = arith.addf %45, %61 : vector<1x8x16xf32>
    %63 = arith.truncf %61 : vector<1x8x16xf32> to vector<1x8x16xbf16>
    %64 = vector.extract_strided_slice %28 {offsets = [0, 0, 8], sizes = [1, 16, 8], strides = [1, 1, 1]} : vector<1x16x32xbf16> to vector<1x16x8xbf16>
    "tpu.trace_start"() <{level = 10 : i32, message = "bqk,bkd->bqd"}> : () -> ()
    %cst_26 = arith.constant dense<0.000000e+00> : vector<1x8x8xf32>
    %65 = tpu.matmul %63, %64, %cst_26 {dimension_numbers = #tpu.dot_dimension_numbers<[2], [1], [1], [2], [0, 0, 0, 1, 1, 2], [0], [0]>} : vector<1x8x16xbf16>, vector<1x16x8xbf16>, vector<1x8x8xf32> -> vector<1x8x8xf32>
    "tpu.trace_stop"() : () -> ()
    %66 = vector.extract_strided_slice %22 {offsets = [0, 0, 16], sizes = [1, 8, 8], strides = [1, 1, 1]} : vector<1x8x32xbf16> to vector<1x8x8xbf16>
    %67 = vector.extract_strided_slice %25 {offsets = [0, 0, 16], sizes = [1, 16, 8], strides = [1, 1, 1]} : vector<1x16x32xbf16> to vector<1x16x8xbf16>
    "tpu.trace_start"() <{level = 10 : i32, message = "bqd,bkd->bqk"}> : () -> ()
    %cst_27 = arith.constant dense<0.000000e+00> : vector<1x8x16xf32>
    %68 = tpu.matmul %66, %67, %cst_27 {dimension_numbers = #tpu.dot_dimension_numbers<[2], [2], [1], [1], [0, 0, 0, 1, 1, 1], [0], [0]>} : vector<1x8x8xbf16>, vector<1x16x8xbf16>, vector<1x8x16xf32> -> vector<1x8x16xf32>
    "tpu.trace_stop"() : () -> ()
    %69 = arith.addf %68, %30 : vector<1x8x16xf32>
    %cst_28 = arith.constant dense<0xFF800000> : vector<1x8xf32>
    %70 = vector.multi_reduction <maximumf>, %69, %cst_28 [2] : vector<1x8x16xf32> to vector<1x8xf32>
    %71 = vector.shape_cast %70 : vector<1x8xf32> to vector<1x8x1xf32>
    %72 = vector.broadcast %71 : vector<1x8x1xf32> to vector<1x8x16xf32>
    %73 = arith.subf %69, %72 : vector<1x8x16xf32>
    %74 = math.exp %73 : vector<1x8x16xf32>
    %cst_29 = arith.constant dense<0.000000e+00> : vector<1x8xf32>
    %75 = vector.multi_reduction <add>, %74, %cst_29 [2] : vector<1x8x16xf32> to vector<1x8xf32>
    %76 = vector.shape_cast %75 : vector<1x8xf32> to vector<1x8x1xf32>
    %77 = vector.broadcast %76 : vector<1x8x1xf32> to vector<1x8x16xf32>
    %78 = arith.divf %74, %77 : vector<1x8x16xf32>
    %79 = arith.addf %62, %78 : vector<1x8x16xf32>
    %80 = arith.truncf %78 : vector<1x8x16xf32> to vector<1x8x16xbf16>
    %81 = vector.extract_strided_slice %28 {offsets = [0, 0, 16], sizes = [1, 16, 8], strides = [1, 1, 1]} : vector<1x16x32xbf16> to vector<1x16x8xbf16>
    "tpu.trace_start"() <{level = 10 : i32, message = "bqk,bkd->bqd"}> : () -> ()
    %cst_30 = arith.constant dense<0.000000e+00> : vector<1x8x8xf32>
    %82 = tpu.matmul %80, %81, %cst_30 {dimension_numbers = #tpu.dot_dimension_numbers<[2], [1], [1], [2], [0, 0, 0, 1, 1, 2], [0], [0]>} : vector<1x8x16xbf16>, vector<1x16x8xbf16>, vector<1x8x8xf32> -> vector<1x8x8xf32>
    "tpu.trace_stop"() : () -> ()
    %83 = vector.extract_strided_slice %22 {offsets = [0, 0, 24], sizes = [1, 8, 8], strides = [1, 1, 1]} : vector<1x8x32xbf16> to vector<1x8x8xbf16>
    %84 = vector.extract_strided_slice %25 {offsets = [0, 0, 24], sizes = [1, 16, 8], strides = [1, 1, 1]} : vector<1x16x32xbf16> to vector<1x16x8xbf16>
    "tpu.trace_start"() <{level = 10 : i32, message = "bqd,bkd->bqk"}> : () -> ()
    %cst_31 = arith.constant dense<0.000000e+00> : vector<1x8x16xf32>
    %85 = tpu.matmul %83, %84, %cst_31 {dimension_numbers = #tpu.dot_dimension_numbers<[2], [2], [1], [1], [0, 0, 0, 1, 1, 1], [0], [0]>} : vector<1x8x8xbf16>, vector<1x16x8xbf16>, vector<1x8x16xf32> -> vector<1x8x16xf32>
    "tpu.trace_stop"() : () -> ()
    %86 = arith.addf %85, %30 : vector<1x8x16xf32>
    %cst_32 = arith.constant dense<0xFF800000> : vector<1x8xf32>
    %87 = vector.multi_reduction <maximumf>, %86, %cst_32 [2] : vector<1x8x16xf32> to vector<1x8xf32>
    %88 = vector.shape_cast %87 : vector<1x8xf32> to vector<1x8x1xf32>
    %89 = vector.broadcast %88 : vector<1x8x1xf32> to vector<1x8x16xf32>
    %90 = arith.subf %86, %89 : vector<1x8x16xf32>
    %91 = math.exp %90 : vector<1x8x16xf32>
    %cst_33 = arith.constant dense<0.000000e+00> : vector<1x8xf32>
    %92 = vector.multi_reduction <add>, %91, %cst_33 [2] : vector<1x8x16xf32> to vector<1x8xf32>
    %93 = vector.shape_cast %92 : vector<1x8xf32> to vector<1x8x1xf32>
    %94 = vector.broadcast %93 : vector<1x8x1xf32> to vector<1x8x16xf32>
    %95 = arith.divf %91, %94 : vector<1x8x16xf32>
    %96 = arith.addf %79, %95 : vector<1x8x16xf32>
    %97 = arith.truncf %95 : vector<1x8x16xf32> to vector<1x8x16xbf16>
    %98 = vector.extract_strided_slice %28 {offsets = [0, 0, 24], sizes = [1, 16, 8], strides = [1, 1, 1]} : vector<1x16x32xbf16> to vector<1x16x8xbf16>
    "tpu.trace_start"() <{level = 10 : i32, message = "bqk,bkd->bqd"}> : () -> ()
    %cst_34 = arith.constant dense<0.000000e+00> : vector<1x8x8xf32>
    %99 = tpu.matmul %97, %98, %cst_34 {dimension_numbers = #tpu.dot_dimension_numbers<[2], [1], [1], [2], [0, 0, 0, 1, 1, 2], [0], [0]>} : vector<1x8x16xbf16>, vector<1x16x8xbf16>, vector<1x8x8xf32> -> vector<1x8x8xf32>
    "tpu.trace_stop"() : () -> ()
    %100 = tpu.concatenate %48, %65, %82, %99 in 2 : vector<1x8x8xf32>, vector<1x8x8xf32>, vector<1x8x8xf32>, vector<1x8x8xf32> -> vector<1x8x32xf32>
    %101 = vector.shape_cast %100 : vector<1x8x32xf32> to vector<8x32xf32>
    %102 = arith.truncf %101 : vector<8x32xf32> to vector<8x32xbf16>
    %c0_35 = arith.constant 0 : index
    %c0_36 = arith.constant 0 : index
    %103 = vector.load %arg7[%c0_35, %c0_36] : memref<32x32xbf16, #tpu.memory_space<vmem>>, vector<32x32xbf16>
    %cst_37 = arith.constant dense<0.000000e+00> : vector<8x32xf32>
    %104 = tpu.matmul %102, %103, %cst_37 {dimension_numbers = #tpu.dot_dimension_numbers<[1], [0], [0], [1], [0, 0, 1, 1], [], []>} : vector<8x32xbf16>, vector<32x32xbf16>, vector<8x32xf32> -> vector<8x32xf32>
    %105 = vector.broadcast %11 : vector<1x32xf32> to vector<8x32xf32>
    %106 = arith.addf %104, %105 : vector<8x32xf32>
    %107 = arith.addf %106, %5 : vector<8x32xf32>
    %108 = vector.shape_cast %107 : vector<8x32xf32> to vector<1x8x32xf32>
    %c0_38 = arith.constant 0 : index
    %c0_39 = arith.constant 0 : index
    %c0_40 = arith.constant 0 : index
    %109 = vector.load %arg9[%c0_38, %c0_39, %c0_40] : memref<1x8x32xf32, #tpu.memory_space<vmem>>, vector<1x8x32xf32>
    tpu.vector_store %arg9[%c0_38, %c0_39, %c0_40], %108 {strides = array<i32>} : memref<1x8x32xf32, #tpu.memory_space<vmem>>, vector<1x8x32xf32>,
    %cst_41 = arith.constant 2.500000e-01 : f32
    %110 = vector.broadcast %cst_41 : f32 to vector<1x8x16xf32>
    %111 = arith.mulf %96, %110 : vector<1x8x16xf32>
    %c0_42 = arith.constant 0 : index
    %c0_43 = arith.constant 0 : index
    %c0_44 = arith.constant 0 : index
    %112 = vector.load %arg10[%c0_42, %c0_43, %c0_44] : memref<1x8x16xf32, #tpu.memory_space<vmem>>, vector<1x8x16xf32>
    tpu.vector_store %arg10[%c0_42, %c0_43, %c0_44], %111 {strides = array<i32>} : memref<1x8x16xf32, #tpu.memory_space<vmem>>, vector<1x8x16xf32>,
    return
  }
  func.func @transform_0(%arg0: i32) -> (i32, i32, i32) {
    %c0_i32 = arith.constant 0 : i32
    %c0_i32_0 = arith.constant 0 : i32
    %c0_i32_1 = arith.constant 0 : i32
    return %arg0, %c0_i32, %c0_i32_0 : i32, i32, i32
  }
  func.func @transform_1(%arg0: i32) -> (i32, i32, i32) {
    %c0_i32 = arith.constant 0 : i32
    %c0_i32_0 = arith.constant 0 : i32
    %c0_i32_1 = arith.constant 0 : i32
    return %arg0, %c0_i32, %c0_i32_0 : i32, i32, i32
  }
  func.func @transform_2(%arg0: i32) -> (i32, i32, i32) {
    %c0_i32 = arith.constant 0 : i32
    %c0_i32_0 = arith.constant 0 : i32
    %c0_i32_1 = arith.constant 0 : i32
    return %arg0, %c0_i32, %c0_i32_0 : i32, i32, i32
  }
  func.func @transform_3(%arg0: i32) -> (i32, i32, i32) {
    %c0_i32 = arith.constant 0 : i32
    %c0_i32_0 = arith.constant 0 : i32
    %c0_i32_1 = arith.constant 0 : i32
    return %arg0, %c0_i32, %c0_i32_0 : i32, i32, i32
  }
  func.func @transform_4(%arg0: i32) -> (i32, i32) {
    %c0_i32 = arith.constant 0 : i32
    %c0_i32_0 = arith.constant 0 : i32
    %c0_i32_1 = arith.constant 0 : i32
    return %c0_i32, %c0_i32_0 : i32, i32
  }
  func.func @transform_5(%arg0: i32) -> (i32, i32) {
    %c0_i32 = arith.constant 0 : i32
    %c0_i32_0 = arith.constant 0 : i32
    %c0_i32_1 = arith.constant 0 : i32
    return %c0_i32, %c0_i32_0 : i32, i32
  }
  func.func @transform_6(%arg0: i32) -> (i32, i32) {
    %c0_i32 = arith.constant 0 : i32
    %c0_i32_0 = arith.constant 0 : i32
    %c0_i32_1 = arith.constant 0 : i32
    return %c0_i32, %c0_i32_0 : i32, i32
  }
  func.func @transform_7(%arg0: i32) -> (i32, i32) {
    %c0_i32 = arith.constant 0 : i32
    %c0_i32_0 = arith.constant 0 : i32
    %c0_i32_1 = arith.constant 0 : i32
    return %c0_i32, %c0_i32_0 : i32, i32
  }
  func.func @transform_8(%arg0: i32) -> (i32, i32, i32) {
    %c0_i32 = arith.constant 0 : i32
    %c0_i32_0 = arith.constant 0 : i32
    %c0_i32_1 = arith.constant 0 : i32
    return %arg0, %c0_i32, %c0_i32_0 : i32, i32, i32
  }
  func.func @transform_9(%arg0: i32) -> (i32, i32, i32) {
    %c0_i32 = arith.constant 0 : i32
    %c0_i32_0 = arith.constant 0 : i32
    %c0_i32_1 = arith.constant 0 : i32
    return %arg0, %c0_i32, %c0_i32_0 : i32, i32, i32
  }
}

</mosaic_0001>

<llo_original>
// kernel: tpu_custom_call.1
$region0: #{tpu_custom_call.1}
  #allocation0 [shape = 'u32[]', space=smem, size = 0x4, offset = 0x4, fixed_abs, tag = 'smem constant byte address 0x4 - core index']
  #allocation1 [shape = 'u32[144,128]{1,0:T(1,128)}', space=vmem, size = 0x12000, scoped, tag = 'internal scratch']
  %s0 = inlined_call_operand.hbm [shape: bf16[2,8,32], index: 0, kind: input, shape index: {}]
  %s1 = inlined_call_operand.hbm [shape: bf16[2,8,32], index: 1, kind: input, shape index: {}]
  %s2 = inlined_call_operand.hbm [shape: bf16[2,16,32], index: 2, kind: input, shape index: {}]
  %s3 = inlined_call_operand.hbm [shape: bf16[2,8,16], index: 3, kind: input, shape index: {}]
  %s4 = inlined_call_operand.hbm [shape: bf16[32,32], index: 4, kind: input, shape index: {}]
  %s5 = inlined_call_operand.vmem [shape: bf16[32,64], index: 5, kind: input, shape index: {}]
  %s6 = inlined_call_operand.hbm [shape: bf16[32,32], index: 6, kind: input, shape index: {}]
  %s7 = inlined_call_operand.vmem [shape: f32[1,128], index: 7, kind: input, shape index: {}]
  %s8 = inlined_call_operand.hbm [shape: f32[2,8,32], index: 8, kind: output, shape index: {0}]
  %s9 = inlined_call_operand.hbm [shape: f32[2,8,16], index: 9, kind: output, shape index: {1}]
  %10 = xla_tuple %s8, %s9
  %s11 = sld [smem:[#allocation0]]
  $region97: #{tpu_custom_call.1} parent=0
    _
  %s13 = ssub.s32 1, %s11
  %s14 = scalar_select 0, %s13, %s11
  $region1: #{tpu_custom_call.1} parent=0
    #allocation2 [shape = 'u8[4096]{0}', space=vmem, size = 0x1000, scoped, tag = 'input window, operand 0']
    #allocation3 [shape = 's32[2]{0}', space=sflag, size = 0x8, scoped, tag = 'scoped memory for tpu_custom_call.1']
    #allocation4 [shape = 's32[2]{0}', space=sflag, size = 0x8, scoped, tag = 'scoped memory for tpu_custom_call.1']
    #allocation5 [shape = 'u8[4096]{0}', space=vmem, size = 0x1000, scoped, tag = 'input window, operand 1']
    #allocation6 [shape = 's32[2]{0}', space=sflag, size = 0x8, scoped, tag = 'scoped memory for tpu_custom_call.1']
    #allocation7 [shape = 'u8[8192]{0}', space=vmem, size = 0x2000, scoped, tag = 'input window, operand 2']
    #allocation8 [shape = 'u8[4096]{0}', space=vmem, size = 0x1000, scoped, tag = 'input window, operand 3']
    #allocation9 [shape = 's32[2]{0}', space=sflag, size = 0x8, scoped, tag = 'scoped memory for tpu_custom_call.1']
    #allocation10 [shape = 'u8[8192]{0}', space=vmem, size = 0x2000, scoped, tag = 'input window, operand 4, single buffered']
    #allocation11 [shape = 'u8[8192]{0}', space=vmem, size = 0x2000, scoped, tag = 'input window, operand 6, single buffered']
    #allocation12 [shape = 's32[1]{0}', space=sflag, size = 0x4, scoped, tag = 'scoped memory for tpu_custom_call.1']
    #allocation13 [shape = 'u8[8192]{0}', space=vmem, size = 0x2000, scoped, tag = 'output window, operand 0']
    #allocation14 [shape = 'u8[8192]{0}', space=vmem, size = 0x2000, scoped, tag = 'output window, operand 1']
    #allocation15 [shape = 's32[2]{0}', space=sflag, size = 0x8, scoped, tag = 'scoped memory for tpu_custom_call.1']
    %15 = vsyncpa [#allocation3], 0
    %s16 = scalar_lea.sflag [#allocation3], 1
    %17 = vsyncpa %s16, 0
    %18 = vsyncpa [#allocation6], 0
    %s19 = scalar_lea.sflag [#allocation6], 1
    %20 = vsyncpa %s19, 0
    %21 = vsyncpa [#allocation9], 0
    %s22 = scalar_lea.sflag [#allocation9], 1
    %23 = vsyncpa %s22, 0
    %24 = vsyncpa [#allocation12], 0
    %25 = vsyncpa [#allocation4], 0
    %s26 = scalar_lea.sflag [#allocation4], 1
    %27 = vsyncpa %s26, 0
    %28 = vsyncpa [#allocation15], 0
    %s29 = scalar_lea.sflag [#allocation15], 1
    %30 = vsyncpa %s29, 0
    loop: start=0, step=1, limit=4
    $region2: #{tpu_custom_call.1} parent=1 // loop_pre_header
      _
    $region3: #{tpu_custom_call.1} parent=1 // loop_header
      %s32 = sphi 0, %s36
      %p33 = scmp.ge.s32.totalorder %s32, 4
      %s42 = sphi 0, %s44
      %s45 = sphi 0, %s42
      %s46 = sphi 0, %s45
      %s62 = sphi 0, %s46
      %s68 = sphi 0, %s70
      %s71 = sphi 0, %s68
      %s72 = sphi 0, %s71
      %s88 = sphi 0, %s72
      %s94 = sphi 0, %s96
      %s97 = sphi 0, %s94
      %s98 = sphi 0, %s97
      %s114 = sphi 0, %s98
      %s120 = sphi 0, %s122
      %s123 = sphi 0, %s120
      %s124 = sphi 0, %s123
      %s140 = sphi 0, %s124
      %s144 = sphi 0, %s144
      %s146 = sphi 0, %s144
      %s147 = sphi 0, %s146
      %s161 = sphi 0, %s147
      %s165 = sphi 0, %s165
      %s167 = sphi 0, %s165
      %s168 = sphi 0, %s167
      %s182 = sphi 0, %s168
      %s186 = sphi 0, %s186
      %s188 = sphi 0, %s186
      %s189 = sphi 0, %s188
      %s203 = sphi 0, %s189
      %s207 = sphi 0, %s207
      %s209 = sphi 0, %s207
      %s210 = sphi 0, %s209
      %s224 = sphi 0, %s210
      %s230 = sphi 0, %s232
      %s233 = sphi 0, %s230
      %s234 = sphi 0, %s233
      %s250 = sphi 0, %s234
      %s256 = sphi 0, %s258
      %s259 = sphi 0, %s256
      %s260 = sphi 0, %s259
      %s276 = sphi 0, %s260
    $region4: #{tpu_custom_call.1} parent=1 // loop_header_branch
      %35 = sbr.rel (%p33) target = $region8
    $region5: #{tpu_custom_call.1} parent=1 // loop_body
      %s37 = ssub.s32 %s32, 1
      %s38 = ssub.s32 %s32, 2
      %s39 = sadd.s32 %s32, 1
      %s40 = ssub.s32 %s32, %s39
      %p41 = scmp.eq.s32.totalorder %s40, 0
      %s43 = sadd.s32 %s42, 1
      %s44 = scalar_select %p41, %s42, %s43
      %p47 = pneg %p41
      %p48 = scmp.eq.s32.totalorder %s32, 1
      %p49 = por %p47, %p48
      %p50 = scmp.ne.s32.totalorder %s42, %s45
      %p51 = scmp.eq.s32.totalorder %s32, 0
      %p52 = por %p50, %p51
      %p53 = scmp.ne.s32.totalorder %s42, %s45
      %p54 = scmp.eq.s32.totalorder %s37, 1
      %p55 = por %p53, %p54
      %p56 = scmp.ne.s32.totalorder %s45, %s46
      %p57 = scmp.eq.s32.totalorder %s37, 0
      %p58 = por %p56, %p57
      %p59 = scmp.ne.s32.totalorder %s45, %s46
      %p60 = scmp.eq.s32.totalorder %s38, 1
      %p61 = por %p59, %p60
      %p63 = scmp.ne.s32.totalorder %s46, %s62
      %p64 = scmp.eq.s32.totalorder %s38, 0
      %p65 = por %p63, %p64
      %s66 = ssub.s32 %s32, %s39
      %p67 = scmp.eq.s32.totalorder %s66, 0
      %s69 = sadd.s32 %s68, 1
      %s70 = scalar_select %p67, %s68, %s69
      %p73 = pneg %p67
      %p74 = scmp.eq.s32.totalorder %s32, 1
      %p75 = por %p73, %p74
      %p76 = scmp.ne.s32.totalorder %s68, %s71
      %p77 = scmp.eq.s32.totalorder %s32, 0
      %p78 = por %p76, %p77
      %p79 = scmp.ne.s32.totalorder %s68, %s71
      %p80 = scmp.eq.s32.totalorder %s37, 1
      %p81 = por %p79, %p80
      %p82 = scmp.ne.s32.totalorder %s71, %s72
      %p83 = scmp.eq.s32.totalorder %s37, 0
      %p84 = por %p82, %p83
      %p85 = scmp.ne.s32.totalorder %s71, %s72
      %p86 = scmp.eq.s32.totalorder %s38, 1
      %p87 = por %p85, %p86
      %p89 = scmp.ne.s32.totalorder %s72, %s88
      %p90 = scmp.eq.s32.totalorder %s38, 0
      %p91 = por %p89, %p90
      %s92 = ssub.s32 %s32, %s39
      %p93 = scmp.eq.s32.totalorder %s92, 0
      %s95 = sadd.s32 %s94, 1
      %s96 = scalar_select %p93, %s94, %s95
      %p99 = pneg %p93
      %p100 = scmp.eq.s32.totalorder %s32, 1
      %p101 = por %p99, %p100
      %p102 = scmp.ne.s32.totalorder %s94, %s97
      %p103 = scmp.eq.s32.totalorder %s32, 0
      %p104 = por %p102, %p103
      %p105 = scmp.ne.s32.totalorder %s94, %s97
      %p106 = scmp.eq.s32.totalorder %s37, 1
      %p107 = por %p105, %p106
      %p108 = scmp.ne.s32.totalorder %s97, %s98
      %p109 = scmp.eq.s32.totalorder %s37, 0
      %p110 = por %p108, %p109
      %p111 = scmp.ne.s32.totalorder %s97, %s98
      %p112 = scmp.eq.s32.totalorder %s38, 1
      %p113 = por %p111, %p112
      %p115 = scmp.ne.s32.totalorder %s98, %s114
      %p116 = scmp.eq.s32.totalorder %s38, 0
      %p117 = por %p115, %p116
      %s118 = ssub.s32 %s32, %s39
      %p119 = scmp.eq.s32.totalorder %s118, 0
      %s121 = sadd.s32 %s120, 1
      %s122 = scalar_select %p119, %s120, %s121
      %p125 = pneg %p119
      %p126 = scmp.eq.s32.totalorder %s32, 1
      %p127 = por %p125, %p126
      %p128 = scmp.ne.s32.totalorder %s120, %s123
      %p129 = scmp.eq.s32.totalorder %s32, 0
      %p130 = por %p128, %p129
      %p131 = scmp.ne.s32.totalorder %s120, %s123
      %p132 = scmp.eq.s32.totalorder %s37, 1
      %p133 = por %p131, %p132
      %p134 = scmp.ne.s32.totalorder %s123, %s124
      %p135 = scmp.eq.s32.totalorder %s37, 0
      %p136 = por %p134, %p135
      %p137 = scmp.ne.s32.totalorder %s123, %s124
      %p138 = scmp.eq.s32.totalorder %s38, 1
      %p139 = por %p137, %p138
      %p141 = scmp.ne.s32.totalorder %s124, %s140
      %p142 = scmp.eq.s32.totalorder %s38, 0
      %p143 = por %p141, %p142
      %s145 = sadd.s32 %s144, 1
      %p148 = scmp.eq.s32.totalorder %s32, 1
      %p149 = scmp.ne.s32.totalorder %s144, %s146
      %p150 = scmp.eq.s32.totalorder %s32, 0
      %p151 = por %p149, %p150
      %p152 = scmp.ne.s32.totalorder %s144, %s146
      %p153 = scmp.eq.s32.totalorder %s37, 1
      %p154 = por %p152, %p153
      %p155 = scmp.ne.s32.totalorder %s146, %s147
      %p156 = scmp.eq.s32.totalorder %s37, 0
      %p157 = por %p155, %p156
      %p158 = scmp.ne.s32.totalorder %s146, %s147
      %p159 = scmp.eq.s32.totalorder %s38, 1
      %p160 = por %p158, %p159
      %p162 = scmp.ne.s32.totalorder %s147, %s161
      %p163 = scmp.eq.s32.totalorder %s38, 0
      %p164 = por %p162, %p163
      %s166 = sadd.s32 %s165, 1
      %p169 = scmp.eq.s32.totalorder %s32, 1
      %p170 = scmp.ne.s32.totalorder %s165, %s167
      %p171 = scmp.eq.s32.totalorder %s32, 0
      %p172 = por %p170, %p171
      %p173 = scmp.ne.s32.totalorder %s165, %s167
      %p174 = scmp.eq.s32.totalorder %s37, 1
      %p175 = por %p173, %p174
      %p176 = scmp.ne.s32.totalorder %s167, %s168
      %p177 = scmp.eq.s32.totalorder %s37, 0
      %p178 = por %p176, %p177
      %p179 = scmp.ne.s32.totalorder %s167, %s168
      %p180 = scmp.eq.s32.totalorder %s38, 1
      %p181 = por %p179, %p180
      %p183 = scmp.ne.s32.totalorder %s168, %s182
      %p184 = scmp.eq.s32.totalorder %s38, 0
      %p185 = por %p183, %p184
      %s187 = sadd.s32 %s186, 1
      %p190 = scmp.eq.s32.totalorder %s32, 1
      %p191 = scmp.ne.s32.totalorder %s186, %s188
      %p192 = scmp.eq.s32.totalorder %s32, 0
      %p193 = por %p191, %p192
      %p194 = scmp.ne.s32.totalorder %s186, %s188
      %p195 = scmp.eq.s32.totalorder %s37, 1
      %p196 = por %p194, %p195
      %p197 = scmp.ne.s32.totalorder %s188, %s189
      %p198 = scmp.eq.s32.totalorder %s37, 0
      %p199 = por %p197, %p198
      %p200 = scmp.ne.s32.totalorder %s188, %s189
      %p201 = scmp.eq.s32.totalorder %s38, 1
      %p202 = por %p200, %p201
      %p204 = scmp.ne.s32.totalorder %s189, %s203
      %p205 = scmp.eq.s32.totalorder %s38, 0
      %p206 = por %p204, %p205
      %s208 = sadd.s32 %s207, 1
      %p211 = scmp.eq.s32.totalorder %s32, 1
      %p212 = scmp.ne.s32.totalorder %s207, %s209
      %p213 = scmp.eq.s32.totalorder %s32, 0
      %p214 = por %p212, %p213
      %p215 = scmp.ne.s32.totalorder %s207, %s209
      %p216 = scmp.eq.s32.totalorder %s37, 1
      %p217 = por %p215, %p216
      %p218 = scmp.ne.s32.totalorder %s209, %s210
      %p219 = scmp.eq.s32.totalorder %s37, 0
      %p220 = por %p218, %p219
      %p221 = scmp.ne.s32.totalorder %s209, %s210
      %p222 = scmp.eq.s32.totalorder %s38, 1
      %p223 = por %p221, %p222
      %p225 = scmp.ne.s32.totalorder %s210, %s224
      %p226 = scmp.eq.s32.totalorder %s38, 0
      %p227 = por %p225, %p226
      %s228 = ssub.s32 %s32, %s39
      %p229 = scmp.eq.s32.totalorder %s228, 0
      %s231 = sadd.s32 %s230, 1
      %s232 = scalar_select %p229, %s230, %s231
      %p235 = pneg %p229
      %p236 = scmp.eq.s32.totalorder %s32, 1
      %p237 = por %p235, %p236
      %p238 = scmp.ne.s32.totalorder %s230, %s233
      %p239 = scmp.eq.s32.totalorder %s32, 0
      %p240 = por %p238, %p239
      %p241 = scmp.ne.s32.totalorder %s230, %s233
      %p242 = scmp.eq.s32.totalorder %s37, 1
      %p243 = por %p241, %p242
      %p244 = scmp.ne.s32.totalorder %s233, %s234
      %p245 = scmp.eq.s32.totalorder %s37, 0
      %p246 = por %p244, %p245
      %p247 = scmp.ne.s32.totalorder %s233, %s234
      %p248 = scmp.eq.s32.totalorder %s38, 1
      %p249 = por %p247, %p248
      %p251 = scmp.ne.s32.totalorder %s234, %s250
      %p252 = scmp.eq.s32.totalorder %s38, 0
      %p253 = por %p251, %p252
      %s254 = ssub.s32 %s32, %s39
      %p255 = scmp.eq.s32.totalorder %s254, 0
      %s257 = sadd.s32 %s256, 1
      %s258 = scalar_select %p255, %s256, %s257
      %p261 = pneg %p255
      %p262 = scmp.eq.s32.totalorder %s32, 1
      %p263 = por %p261, %p262
      %p264 = scmp.ne.s32.totalorder %s256, %s259
      %p265 = scmp.eq.s32.totalorder %s32, 0
      %p266 = por %p264, %p265
      %p267 = scmp.ne.s32.totalorder %s256, %s259
      %p268 = scmp.eq.s32.totalorder %s37, 1
      %p269 = por %p267, %p268
      %p270 = scmp.ne.s32.totalorder %s259, %s260
      %p271 = scmp.eq.s32.totalorder %s37, 0
      %p272 = por %p270, %p271
      %p273 = scmp.ne.s32.totalorder %s259, %s260
      %p274 = scmp.eq.s32.totalorder %s38, 1
      %p275 = por %p273, %p274
      %p277 = scmp.ne.s32.totalorder %s260, %s276
      %p278 = scmp.eq.s32.totalorder %s38, 0
      %p279 = por %p277, %p278
      %p280 = scmp.le.s32.totalorder 1, %s32
      %p281 = scmp.lt.s32.totalorder %s32, 3
      %p282 = pnand %p280, %p281
      %p283 = pneg %p282
      // Predicated region
      $region9: #{tpu_custom_call.1} parent=5 // pred_check
        _
      $region10: #{tpu_custom_call.1} parent=5 // pred_check_branch
        %285 = sbr.rel (%p282) target = $region12
      $region11: #{tpu_custom_call.1} parent=5 // pred_region
        %s286 = ssub.s32 %s32, 1
        // Predicated region
        $region13: #{tpu_custom_call.1} parent=11 // pred_check
          %p287 = pneg %p157
        $region14: #{tpu_custom_call.1} parent=11 // pred_check_branch
          %289 = sbr.rel (%p287) target = $region16
        $region15: #{tpu_custom_call.1} parent=11 // pred_region
          %s291 = ssub.s32 256, 256
          %292 = vsyncadd [#allocation9], %s291
          %s293 = sshll.u32 [#allocation10], 4
          %s294 = int_to_ptr.vmem [resolvable:$true] %s293
          %299 = dma.hbm_to_vmem [thread:$0]  %s4, 256, %s294, [#allocation9], 64, 64, 4
        $region16: #{tpu_custom_call.1} parent=11 // pred_fallthru
          _
        // Predicated region
        $region17: #{tpu_custom_call.1} parent=11 // pred_check
          %p300 = pneg %p178
        $region18: #{tpu_custom_call.1} parent=11 // pred_check_branch
          %302 = sbr.rel (%p300) target = $region20
        $region19: #{tpu_custom_call.1} parent=11 // pred_region
          _
        $region20: #{tpu_custom_call.1} parent=11 // pred_fallthru
          _
        // Predicated region
        $region21: #{tpu_custom_call.1} parent=11 // pred_check
          %p303 = pneg %p199
        $region22: #{tpu_custom_call.1} parent=11 // pred_check_branch
          %305 = sbr.rel (%p303) target = $region24
        $region23: #{tpu_custom_call.1} parent=11 // pred_region
          %s307 = ssub.s32 256, 256
          %308 = vsyncadd [#allocation12], %s307
          %s309 = sshll.u32 [#allocation11], 4
          %s310 = int_to_ptr.vmem [resolvable:$true] %s309
          %315 = dma.hbm_to_vmem [thread:$0]  %s6, 256, %s310, [#allocation12], 64, 64, 4
        $region24: #{tpu_custom_call.1} parent=11 // pred_fallthru
          _
        // Predicated region
        $region25: #{tpu_custom_call.1} parent=11 // pred_check
          %p316 = pneg %p220
        $region26: #{tpu_custom_call.1} parent=11 // pred_check_branch
          %318 = sbr.rel (%p316) target = $region28
        $region27: #{tpu_custom_call.1} parent=11 // pred_region
          _
        $region28: #{tpu_custom_call.1} parent=11 // pred_fallthru
          _
      $region12: #{tpu_custom_call.1} parent=5 // pred_fallthru
        _
      %p319 = scmp.lt.s32.totalorder %s32, 2
      // Predicated region
      $region29: #{tpu_custom_call.1} parent=5 // pred_check
        %p320 = pneg %p319
      $region30: #{tpu_custom_call.1} parent=5 // pred_check_branch
        %322 = sbr.rel (%p320) target = $region32
      $region31: #{tpu_custom_call.1} parent=5 // pred_region
        // Predicated region
        $region33: #{tpu_custom_call.1} parent=31 // pred_check
          %p323 = pneg %p52
        $region34: #{tpu_custom_call.1} parent=31 // pred_check_branch
          %325 = sbr.rel (%p323) target = $region36
        $region35: #{tpu_custom_call.1} parent=31 // pred_region
          %s326 = sand.u32 %s42, 1
          %s327 = scalar_lea.sflag [#allocation3], %s326
          %s328 = sand.u32 %s42, 1
          %s329 = smul.addr %s328, 4
          %s330 = scalar_lea.vmem [#allocation2], %s329
          %s332 = ssub.s32 64, 64
          %333 = vsyncadd %s327, %s332
          %s334 = smul.addr %s32, 64
          %s335 = scalar_lea.hbm %s0, %s334
          %s337 = sshll.u32 %s330, 4
          %s338 = int_to_ptr.vmem [resolvable:$true] %s337
          %340 = dma.hbm_to_vmem [thread:$0]  %s335, 64, %s338, %s327
        $region36: #{tpu_custom_call.1} parent=31 // pred_fallthru
          _
        // Predicated region
        $region37: #{tpu_custom_call.1} parent=31 // pred_check
          %p341 = pneg %p78
        $region38: #{tpu_custom_call.1} parent=31 // pred_check_branch
          %343 = sbr.rel (%p341) target = $region40
        $region39: #{tpu_custom_call.1} parent=31 // pred_region
          %s344 = sand.u32 %s32, 1
          %s345 = scalar_lea.sflag [#allocation6], %s344
          %s346 = sand.u32 %s68, 1
          %s347 = smul.addr %s346, 4
          %s348 = scalar_lea.vmem [#allocation5], %s347
          %s350 = ssub.s32 64, 64
          %351 = vsyncadd %s345, %s350
          %s352 = smul.addr %s32, 64
          %s353 = scalar_lea.hbm %s1, %s352
          %s355 = sshll.u32 %s348, 4
          %s356 = int_to_ptr.vmem [resolvable:$true] %s355
          %358 = dma.hbm_to_vmem [thread:$0]  %s353, 64, %s356, %s345
        $region40: #{tpu_custom_call.1} parent=31 // pred_fallthru
          _
        // Predicated region
        $region41: #{tpu_custom_call.1} parent=31 // pred_check
          %p359 = pneg %p104
        $region42: #{tpu_custom_call.1} parent=31 // pred_check_branch
          %361 = sbr.rel (%p359) target = $region44
        $region43: #{tpu_custom_call.1} parent=31 // pred_region
          %s362 = sand.u32 %s32, 1
          %s363 = scalar_lea.sflag [#allocation6], %s362
          %s364 = sand.u32 %s94, 1
          %s365 = smul.addr %s364, 8
          %s366 = scalar_lea.vmem [#allocation7], %s365
          %s368 = ssub.s32 128, 128
          %369 = vsyncadd %s363, %s368
          %s370 = smul.addr %s32, 2
          %s371 = smul.addr %s370, 64
          %s372 = scalar_lea.hbm %s2, %s371
          %s373 = sshll.u32 %s366, 4
          %s374 = int_to_ptr.vmem [resolvable:$true] %s373
          %379 = dma.hbm_to_vmem [thread:$0]  %s372, 128, %s374, %s363, 64, 64, 4
        $region44: #{tpu_custom_call.1} parent=31 // pred_fallthru
          _
        // Predicated region
        $region45: #{tpu_custom_call.1} parent=31 // pred_check
          %p380 = pneg %p130
        $region46: #{tpu_custom_call.1} parent=31 // pred_check_branch
          %382 = sbr.rel (%p380) target = $region48
        $region47: #{tpu_custom_call.1} parent=31 // pred_region
          %s383 = sand.u32 %s32, 1
          %s384 = scalar_lea.sflag [#allocation9], %s383
          %s385 = sand.u32 %s120, 1
          %s386 = smul.addr %s385, 4
          %s387 = scalar_lea.vmem [#allocation8], %s386
          %s389 = ssub.s32 64, 64
          %390 = vsyncadd %s384, %s389
          %s391 = smul.addr %s32, 64
          %s392 = scalar_lea.hbm %s3, %s391
          %s394 = sshll.u32 %s387, 4
          %s395 = int_to_ptr.vmem [resolvable:$true] %s394
          %397 = dma.hbm_to_vmem [thread:$0]  %s392, 64, %s395, %s384
        $region48: #{tpu_custom_call.1} parent=31 // pred_fallthru
          _
      $region32: #{tpu_custom_call.1} parent=5 // pred_fallthru
        _
      %p398 = scmp.le.s32.totalorder 1, %s32
      %p399 = scmp.lt.s32.totalorder %s32, 3
      %p400 = pnand %p398, %p399
      %p401 = pneg %p400
      // Predicated region
      $region49: #{tpu_custom_call.1} parent=5 // pred_check
        _
      $region50: #{tpu_custom_call.1} parent=5 // pred_check_branch
        %403 = sbr.rel (%p400) target = $region52
      $region51: #{tpu_custom_call.1} parent=5 // pred_region
        %s404 = ssub.s32 %s32, 1
        %s405 = sand.u32 %s45, 1
        %s406 = scalar_lea.sflag [#allocation3], %s405
        %s407 = sand.u32 %s45, 1
        %s408 = smul.addr %s407, 4
        %s409 = scalar_lea.vmem [#allocation2], %s408
        // Predicated region
        $region53: #{tpu_custom_call.1} parent=51 // pred_check
          %p410 = pneg %p58
        $region54: #{tpu_custom_call.1} parent=51 // pred_check_branch
          %412 = sbr.rel (%p410) target = $region56
        $region55: #{tpu_custom_call.1} parent=51 // pred_region
          %413 = dma.done %s406, 64
        $region56: #{tpu_custom_call.1} parent=51 // pred_fallthru
          _
        %s414 = sand.u32 %s37, 1
        %s415 = scalar_lea.sflag [#allocation6], %s414
        %s416 = sand.u32 %s71, 1
        %s417 = smul.addr %s416, 4
        %s418 = scalar_lea.vmem [#allocation5], %s417
        // Predicated region
        $region57: #{tpu_custom_call.1} parent=51 // pred_check
          %p419 = pneg %p84
        $region58: #{tpu_custom_call.1} parent=51 // pred_check_branch
          %421 = sbr.rel (%p419) target = $region60
        $region59: #{tpu_custom_call.1} parent=51 // pred_region
          %422 = dma.done %s415, 64
        $region60: #{tpu_custom_call.1} parent=51 // pred_fallthru
          _
        %s423 = sand.u32 %s37, 1
        %s424 = scalar_lea.sflag [#allocation6], %s423
        %s425 = sand.u32 %s97, 1
        %s426 = smul.addr %s425, 8
        %s427 = scalar_lea.vmem [#allocation7], %s426
        // Predicated region
        $region61: #{tpu_custom_call.1} parent=51 // pred_check
          %p428 = pneg %p110
        $region62: #{tpu_custom_call.1} parent=51 // pred_check_branch
          %430 = sbr.rel (%p428) target = $region64
        $region63: #{tpu_custom_call.1} parent=51 // pred_region
          %431 = dma.done %s424, 128
        $region64: #{tpu_custom_call.1} parent=51 // pred_fallthru
          _
        %s432 = sand.u32 %s37, 1
        %s433 = scalar_lea.sflag [#allocation9], %s432
        %s434 = sand.u32 %s123, 1
        %s435 = smul.addr %s434, 4
        %s436 = scalar_lea.vmem [#allocation8], %s435
        // Predicated region
        $region65: #{tpu_custom_call.1} parent=51 // pred_check
          %p437 = pneg %p136
        $region66: #{tpu_custom_call.1} parent=51 // pred_check_branch
          %439 = sbr.rel (%p437) target = $region68
        $region67: #{tpu_custom_call.1} parent=51 // pred_region
          %440 = dma.done %s433, 64
        $region68: #{tpu_custom_call.1} parent=51 // pred_fallthru
          _
        // Predicated region
        $region69: #{tpu_custom_call.1} parent=51 // pred_check
          %p441 = pneg %p157
        $region70: #{tpu_custom_call.1} parent=51 // pred_check_branch
          %443 = sbr.rel (%p441) target = $region72
        $region71: #{tpu_custom_call.1} parent=51 // pred_region
          %444 = dma.done [#allocation9], 256
        $region72: #{tpu_custom_call.1} parent=51 // pred_fallthru
          _
        // Predicated region
        $region73: #{tpu_custom_call.1} parent=51 // pred_check
          %p445 = pneg %p199
        $region74: #{tpu_custom_call.1} parent=51 // pred_check_branch
          %447 = sbr.rel (%p445) target = $region76
        $region75: #{tpu_custom_call.1} parent=51 // pred_region
          %448 = dma.done [#allocation12], 256
        $region76: #{tpu_custom_call.1} parent=51 // pred_fallthru
          _
        %s449 = sand.u32 %s45, 1
        %s450 = scalar_lea.sflag [#allocation3], %s449
        %s451 = sand.u32 %s45, 1
        %s452 = smul.addr %s451, 4
        %s453 = scalar_lea.vmem [#allocation2], %s452
        %p454 = pneg %p58
        %p455 = pneg %p55
        %s456 = sand.u32 %s37, 1
        %s457 = scalar_lea.sflag [#allocation6], %s456
        %s458 = sand.u32 %s71, 1
        %s459 = smul.addr %s458, 4
        %s460 = scalar_lea.vmem [#allocation5], %s459
        %p461 = pneg %p84
        %p462 = pneg %p81
        %s463 = sand.u32 %s37, 1
        %s464 = scalar_lea.sflag [#allocation6], %s463
        %s465 = sand.u32 %s97, 1
        %s466 = smul.addr %s465, 8
        %s467 = scalar_lea.vmem [#allocation7], %s466
        %p468 = pneg %p110
        %p469 = pneg %p107
        %s470 = sand.u32 %s37, 1
        %s471 = scalar_lea.sflag [#allocation9], %s470
        %s472 = sand.u32 %s123, 1
        %s473 = smul.addr %s472, 4
        %s474 = scalar_lea.vmem [#allocation8], %s473
        %p475 = pneg %p136
        %p476 = pneg %p133
        %p477 = pneg %p157
        %p478 = pneg %p154
        %p479 = pneg %p178
        %p480 = pneg %p175
        %p481 = pneg %p199
        %p482 = pneg %p196
        %p483 = pneg %p220
        %p484 = pneg %p217
        %p485 = pneg %p246
        %p486 = pneg %p243
        %s487 = sand.u32 %s233, 1
        %s488 = scalar_lea.sflag [#allocation4], %s487
        %s489 = sand.u32 %s233, 1
        %s490 = smul.addr %s489, 8
        %s491 = scalar_lea.vmem [#allocation13], %s490
        %p492 = pneg %p272
        %p493 = pneg %p269
        %s494 = sand.u32 %s259, 1
        %s495 = scalar_lea.sflag [#allocation15], %s494
        %s496 = sand.u32 %s259, 1
        %s497 = smul.addr %s496, 8
        %s498 = scalar_lea.vmem [#allocation14], %s497
        %v500 = vld [vmem:[%s409] sm:$0xf]
        %v501 = vunpack.c.l.bf16 %v500
        %v502 = vld [vmem:[%s418] sm:$0xf]
        %v503 = vunpack.c.l.bf16 %v502
        %v504 = vadd.f32 %v501, %v503
        %v505 = vld [vmem:[%s427] sm:$0xf]
        %v506 = vld [vmem:[%s427 + $0x4] sm:$0xf]
        %v507 = vld [vmem:[%s7] sm:$0x1]
        %v508 = vpack.c.bf16 %v504, %v504
        %v509 = vld [vmem:[#allocation10] sm:$0xf]
        %v510 = vld [vmem:[#allocation10 + $0x4] sm:$0xf]
        %v511 = vld [vmem:[#allocation10 + $0x8] sm:$0xf]
        %v512 = vld [vmem:[#allocation10 + $0xc] sm:$0xf]
        %v514 = vlaneseq
        %v515 = vshrl.u32 %v514, 7
        %v516 = vsub.s32 0, %v515
        %v517 = vrot.slane %v507, %v516
        %v523 = vunpack.c.l.b16 %v509
        %v524 = vunpack.c.l.b16 %v510
        %v525 = vunpack.c.l.b16 %v511
        %v526 = vunpack.c.l.b16 %v512
        %v527 = vpack.c.b16 %v524, %v523
        %v528 = vpack.c.b16 %v526, %v525
        %vm531 = vcmask 261120
        %v533 = vsel %vm531, %v508, 0
        %535 = vmatprep.subr.bf16.mxu0 0
        %536 = vmatpush1.bf16.msra.mxu0 %v527
        %537 = vmatprep.subr.bf16.mxu0 0
        %538 = vmatpush1.bf16.msra.mxu0 %v528
        %539 = vmatprep.subr.bf16.mxu0 0
        %540 = vmatpush1.bf16.msra.mxu0 0
        %541 = vmatprep.subr.bf16.mxu0 0
        %542 = vmatpush1.bf16.msra.mxu0 0
        %543 = vmatprep.subr.bf16.mxu0 0
        %544 = vmatpush1.bf16.msra.mxu0 0
        %545 = vmatprep.subr.bf16.mxu0 0
        %546 = vmatpush1.bf16.msra.mxu0 0
        %547 = vmatprep.subr.bf16.mxu0 0
        %548 = vmatpush1.bf16.msra.mxu0 0
        %549 = vmatprep.subr.bf16.mxu0 0
        %550 = vmatpush1.bf16.msra.mxu0 0
        %551 = vmatprep.subr.bf16.mxu0 0
        %552 = vmatpush1.bf16.msra.mxu0 0
        %553 = vmatprep.subr.bf16.mxu0 0
        %554 = vmatpush1.bf16.msra.mxu0 0
        %555 = vmatprep.subr.bf16.mxu0 0
        %556 = vmatpush1.bf16.msra.mxu0 0
        %557 = vmatprep.subr.bf16.mxu0 0
        %558 = vmatpush1.bf16.msra.mxu0 0
        %559 = vmatprep.subr.bf16.mxu0 0
        %560 = vmatpush1.bf16.msra.mxu0 0
        %561 = vmatprep.subr.bf16.mxu0 0
        %562 = vmatpush1.bf16.msra.mxu0 0
        %563 = vmatprep.subr.bf16.mxu0 0
        %564 = vmatpush1.bf16.msra.mxu0 0
        %565 = vmatprep.subr.bf16.mxu0 0
        %566 = vmatpush1.bf16.msra.mxu0 0
        %567 = vmatprep.mubr.bf16.mxu0 0
        %568 = vmatmul.mubr.bf16.gmra.mrb[0].mxu0 %v533
        %v569 = vpop.f32.mrb[0].mxu0
        %v570 = vadd.f32 %v517, %v569
        %v571 = vpop.f32.mrb[0].mxu0
        %v572 = vpop.f32.mrb[0].mxu0
        %v573 = vpop.f32.mrb[0].mxu0
        %574 = vdwg.mxu0
        %v575 = vld [vmem:[%s5] sm:$0xf]
        %v576 = vld [vmem:[%s5 + $0x4] sm:$0xf]
        %v577 = vld [vmem:[%s5 + $0x8] sm:$0xf]
        %v578 = vld [vmem:[%s5 + $0xc] sm:$0xf]
        %v581 = vunpack.c.l.b16 %v505
        %v582 = vunpack.c.l.b16 %v506
        %v583 = vpack.c.b16 %v582, %v581
        %v588 = vunpack.c.l.b16 %v575
        %v589 = vunpack.c.l.b16 %v576
        %v590 = vunpack.c.l.b16 %v577
        %v591 = vunpack.c.l.b16 %v578
        %v592 = vpack.c.b16 %v589, %v588
        %v593 = vpack.c.b16 %v591, %v590
        %596 = vrot.lane.b32.xlu0 %v517, 96
        %v597 = vpop.permute.xlu0 %596
        %v600 = vsel %vm531, %v583, 0
        %602 = vmatprep.subr.bf16.mxu0 0
        %603 = vmatpush1.bf16.msra.mxu0 %v592
        %604 = vmatprep.subr.bf16.mxu0 0
        %605 = vmatpush1.bf16.msra.mxu0 %v593
        %606 = vmatprep.subr.bf16.mxu0 0
        %607 = vmatpush1.bf16.msra.mxu0 0
        %608 = vmatprep.subr.bf16.mxu0 0
        %609 = vmatpush1.bf16.msra.mxu0 0
        %610 = vmatprep.subr.bf16.mxu0 0
        %611 = vmatpush1.bf16.msra.mxu0 0
        %612 = vmatprep.subr.bf16.mxu0 0
        %613 = vmatpush1.bf16.msra.mxu0 0
        %614 = vmatprep.subr.bf16.mxu0 0
        %615 = vmatpush1.bf16.msra.mxu0 0
        %616 = vmatprep.subr.bf16.mxu0 0
        %617 = vmatpush1.bf16.msra.mxu0 0
        %618 = vmatprep.subr.bf16.mxu0 0
        %619 = vmatpush1.bf16.msra.mxu0 0
        %620 = vmatprep.subr.bf16.mxu0 0
        %621 = vmatpush1.bf16.msra.mxu0 0
        %622 = vmatprep.subr.bf16.mxu0 0
        %623 = vmatpush1.bf16.msra.mxu0 0
        %624 = vmatprep.subr.bf16.mxu0 0
        %625 = vmatpush1.bf16.msra.mxu0 0
        %626 = vmatprep.subr.bf16.mxu0 0
        %627 = vmatpush1.bf16.msra.mxu0 0
        %628 = vmatprep.subr.bf16.mxu0 0
        %629 = vmatpush1.bf16.msra.mxu0 0
        %630 = vmatprep.subr.bf16.mxu0 0
        %631 = vmatpush1.bf16.msra.mxu0 0
        %632 = vmatprep.subr.bf16.mxu0 0
        %633 = vmatpush1.bf16.msra.mxu0 0
        %634 = vmatprep.mubr.bf16.mxu0 0
        %635 = vmatmul.mubr.bf16.gmra.mrb[0].mxu0 %v600
        %v636 = vpop.f32.mrb[0].mxu0
        %v637 = vadd.f32 %v597, %v636
        %v638 = vpop.f32.mrb[0].mxu0
        %v639 = vpop.f32.mrb[0].mxu0
        %v640 = vadd.f32 %v597, %v639
        %v641 = vpop.f32.mrb[0].mxu0
        %642 = vdwg.mxu0
        %v643 = vpack.c.bf16 %v570, %v570
        %v644 = vpack.c.bf16 %v640, %v637
        %v645 = vld [vmem:[%s436] sm:$0xf]
        %v646 = vunpack.c.l.bf16 %v645
        %vm647 = vcmask 64512
        %v649 = vsel %vm647, %v643, 0
        %v652 = vsel %vm647, %v644, 0
        %654 = vmatprep.subr.bf16.mxu0 0
        %655 = vmatpush1.bf16.xpose.msra.mxu0 %v652
        %656 = vmatprep.subr.bf16.mxu0 0
        %657 = vmatpush1.bf16.xpose.msra.mxu0 0
        %658 = vmatprep.subr.bf16.mxu0 0
        %659 = vmatpush1.bf16.xpose.msra.mxu0 0
        %660 = vmatprep.subr.bf16.mxu0 0
        %661 = vmatpush1.bf16.xpose.msra.mxu0 0
        %662 = vmatprep.subr.bf16.mxu0 0
        %663 = vmatpush1.bf16.xpose.msra.mxu0 0
        %664 = vmatprep.subr.bf16.mxu0 0
        %665 = vmatpush1.bf16.xpose.msra.mxu0 0
        %666 = vmatprep.subr.bf16.mxu0 0
        %667 = vmatpush1.bf16.xpose.msra.mxu0 0
        %668 = vmatprep.subr.bf16.mxu0 0
        %669 = vmatpush1.bf16.xpose.msra.mxu0 0
        %670 = vmatprep.subr.bf16.mxu0 0
        %671 = vmatpush1.bf16.xpose.msra.mxu0 0
        %672 = vmatprep.subr.bf16.mxu0 0
        %673 = vmatpush1.bf16.xpose.msra.mxu0 0
        %674 = vmatprep.subr.bf16.mxu0 0
        %675 = vmatpush1.bf16.xpose.msra.mxu0 0
        %676 = vmatprep.subr.bf16.mxu0 0
        %677 = vmatpush1.bf16.xpose.msra.mxu0 0
        %678 = vmatprep.subr.bf16.mxu0 0
        %679 = vmatpush1.bf16.xpose.msra.mxu0 0
        %680 = vmatprep.subr.bf16.mxu0 0
        %681 = vmatpush1.bf16.xpose.msra.mxu0 0
        %682 = vmatprep.subr.bf16.mxu0 0
        %683 = vmatpush1.bf16.xpose.msra.mxu0 0
        %684 = vmatprep.subr.bf16.mxu0 0
        %685 = vmatpush1.bf16.xpose.msra.mxu0 0
        %686 = vmatprep.mubr.bf16.mxu0 0
        %687 = vmatmul.mubr.bf16.gmra.mrb[0].mxu0 %v649
        %v688 = vpop.f32.mrb[0].mxu0
        %v689 = vadd.f32 %v646, %v688
        %v690 = vpop.f32.mrb[0].mxu0
        %v691 = vpop.f32.mrb[0].mxu0
        %v692 = vpop.f32.mrb[0].mxu0
        %693 = vdwg.mxu0
        %vm694 = vcmask 130048
        %v695 = vsel %vm694, %v689, -inf
        %696 = vmax.xlane.f32.xlu0 %v695
        %v697 = vpop.xlane.xlu0 %696
        %v698 = vsub.f32 %v689, %v697
        %v699 = vmul.f32 %v698, 1.442695
        %v700 = vpow.pop %v699
        %v701 = vsel %vm694, %v700, 0.0
        %702 = vadd.xlane.f32.xlu0 %v701
        %v703 = vpop.xlane.xlu0 %702
        %v704 = vrcp.pop %v703
        %v705 = vmul.f32 %v700, %v704
        %v706 = vadd.f32 %v705, 0.0
        %v707 = vpack.c.bf16 %v705, %v705
        %709 = vrot.lane.b32.xlu0 %v644, 96
        %v710 = vpop.permute.xlu0 %709
        %v713 = vsel %vm694, %v707, 0
        %715 = vmatprep.subr.bf16.mxu0 0
        %716 = vmatpush1.bf16.msra.mxu0 %v710
        %717 = vmatprep.subr.bf16.mxu0 0
        %718 = vmatpush1.bf16.msra.mxu0 0
        %719 = vmatprep.subr.bf16.mxu0 0
        %720 = vmatpush1.bf16.msra.mxu0 0
        %721 = vmatprep.subr.bf16.mxu0 0
        %722 = vmatpush1.bf16.msra.mxu0 0
        %723 = vmatprep.subr.bf16.mxu0 0
        %724 = vmatpush1.bf16.msra.mxu0 0
        %725 = vmatprep.subr.bf16.mxu0 0
        %726 = vmatpush1.bf16.msra.mxu0 0
        %727 = vmatprep.subr.bf16.mxu0 0
        %728 = vmatpush1.bf16.msra.mxu0 0
        %729 = vmatprep.subr.bf16.mxu0 0
        %730 = vmatpush1.bf16.msra.mxu0 0
        %731 = vmatprep.subr.bf16.mxu0 0
        %732 = vmatpush1.bf16.msra.mxu0 0
        %733 = vmatprep.subr.bf16.mxu0 0
        %734 = vmatpush1.bf16.msra.mxu0 0
        %735 = vmatprep.subr.bf16.mxu0 0
        %736 = vmatpush1.bf16.msra.mxu0 0
        %737 = vmatprep.subr.bf16.mxu0 0
        %738 = vmatpush1.bf16.msra.mxu0 0
        %739 = vmatprep.subr.bf16.mxu0 0
        %740 = vmatpush1.bf16.msra.mxu0 0
        %741 = vmatprep.subr.bf16.mxu0 0
        %742 = vmatpush1.bf16.msra.mxu0 0
        %743 = vmatprep.subr.bf16.mxu0 0
        %744 = vmatpush1.bf16.msra.mxu0 0
        %745 = vmatprep.subr.bf16.mxu0 0
        %746 = vmatpush1.bf16.msra.mxu0 0
        %747 = vmatprep.mubr.bf16.mxu0 0
        %748 = vmatmul.mubr.bf16.gmra.mrb[0].mxu0 %v713
        %v749 = vpop.f32.mrb[0].mxu0
        %v750 = vadd.f32 0.0, %v749
        %v751 = vpop.f32.mrb[0].mxu0
        %v752 = vpop.f32.mrb[0].mxu0
        %v753 = vpop.f32.mrb[0].mxu0
        %754 = vdwg.mxu0
        %756 = vrot.lane.b32.xlu0 %v643, 120
        %v757 = vpop.permute.xlu0 %756
        %758 = vrot.lane.b32.xlu0 %v644, 120
        %v759 = vpop.permute.xlu0 %758
        %v761 = vsel %vm647, %v757, 0
        %v764 = vsel %vm647, %v759, 0
        %766 = vmatprep.subr.bf16.mxu0 0
        %767 = vmatpush1.bf16.xpose.msra.mxu0 %v764
        %768 = vmatprep.subr.bf16.mxu0 0
        %769 = vmatpush1.bf16.xpose.msra.mxu0 0
        %770 = vmatprep.subr.bf16.mxu0 0
        %771 = vmatpush1.bf16.xpose.msra.mxu0 0
        %772 = vmatprep.subr.bf16.mxu0 0
        %773 = vmatpush1.bf16.xpose.msra.mxu0 0
        %774 = vmatprep.subr.bf16.mxu0 0
        %775 = vmatpush1.bf16.xpose.msra.mxu0 0
        %776 = vmatprep.subr.bf16.mxu0 0
        %777 = vmatpush1.bf16.xpose.msra.mxu0 0
        %778 = vmatprep.subr.bf16.mxu0 0
        %779 = vmatpush1.bf16.xpose.msra.mxu0 0
        %780 = vmatprep.subr.bf16.mxu0 0
        %781 = vmatpush1.bf16.xpose.msra.mxu0 0
        %782 = vmatprep.subr.bf16.mxu0 0
        %783 = vmatpush1.bf16.xpose.msra.mxu0 0
        %784 = vmatprep.subr.bf16.mxu0 0
        %785 = vmatpush1.bf16.xpose.msra.mxu0 0
        %786 = vmatprep.subr.bf16.mxu0 0
        %787 = vmatpush1.bf16.xpose.msra.mxu0 0
        %788 = vmatprep.subr.bf16.mxu0 0
        %789 = vmatpush1.bf16.xpose.msra.mxu0 0
        %790 = vmatprep.subr.bf16.mxu0 0
        %791 = vmatpush1.bf16.xpose.msra.mxu0 0
        %792 = vmatprep.subr.bf16.mxu0 0
        %793 = vmatpush1.bf16.xpose.msra.mxu0 0
        %794 = vmatprep.subr.bf16.mxu0 0
        %795 = vmatpush1.bf16.xpose.msra.mxu0 0
        %796 = vmatprep.subr.bf16.mxu0 0
        %797 = vmatpush1.bf16.xpose.msra.mxu0 0
        %798 = vmatprep.mubr.bf16.mxu0 0
        %799 = vmatmul.mubr.bf16.gmra.mrb[0].mxu0 %v761
        %v800 = vpop.f32.mrb[0].mxu0
        %v801 = vadd.f32 %v646, %v800
        %v802 = vpop.f32.mrb[0].mxu0
        %v803 = vpop.f32.mrb[0].mxu0
        %v804 = vpop.f32.mrb[0].mxu0
        %805 = vdwg.mxu0
        %v806 = vsel %vm694, %v801, -inf
        %807 = vmax.xlane.f32.xlu0 %v806
        %v808 = vpop.xlane.xlu0 %807
        %v809 = vsub.f32 %v801, %v808
        %v810 = vmul.f32 %v809, 1.442695
        %v811 = vpow.pop %v810
        %v812 = vsel %vm694, %v811, 0.0
        %813 = vadd.xlane.f32.xlu0 %v812
        %v814 = vpop.xlane.xlu0 %813
        %v815 = vrcp.pop %v814
        %v816 = vmul.f32 %v811, %v815
        %v817 = vadd.f32 %v706, %v816
        %v818 = vpack.c.bf16 %v816, %v816
        %819 = vrot.lane.b32.xlu0 %v644, 88
        %v820 = vpop.permute.xlu0 %819
        %v823 = vsel %vm694, %v818, 0
        %825 = vmatprep.subr.bf16.mxu0 0
        %826 = vmatpush1.bf16.msra.mxu0 %v820
        %827 = vmatprep.subr.bf16.mxu0 0
        %828 = vmatpush1.bf16.msra.mxu0 0
        %829 = vmatprep.subr.bf16.mxu0 0
        %830 = vmatpush1.bf16.msra.mxu0 0
        %831 = vmatprep.subr.bf16.mxu0 0
        %832 = vmatpush1.bf16.msra.mxu0 0
        %833 = vmatprep.subr.bf16.mxu0 0
        %834 = vmatpush1.bf16.msra.mxu0 0
        %835 = vmatprep.subr.bf16.mxu0 0
        %836 = vmatpush1.bf16.msra.mxu0 0
        %837 = vmatprep.subr.bf16.mxu0 0
        %838 = vmatpush1.bf16.msra.mxu0 0
        %839 = vmatprep.subr.bf16.mxu0 0
        %840 = vmatpush1.bf16.msra.mxu0 0
        %841 = vmatprep.subr.bf16.mxu0 0
        %842 = vmatpush1.bf16.msra.mxu0 0
        %843 = vmatprep.subr.bf16.mxu0 0
        %844 = vmatpush1.bf16.msra.mxu0 0
        %845 = vmatprep.subr.bf16.mxu0 0
        %846 = vmatpush1.bf16.msra.mxu0 0
        %847 = vmatprep.subr.bf16.mxu0 0
        %848 = vmatpush1.bf16.msra.mxu0 0
        %849 = vmatprep.subr.bf16.mxu0 0
        %850 = vmatpush1.bf16.msra.mxu0 0
        %851 = vmatprep.subr.bf16.mxu0 0
        %852 = vmatpush1.bf16.msra.mxu0 0
        %853 = vmatprep.subr.bf16.mxu0 0
        %854 = vmatpush1.bf16.msra.mxu0 0
        %855 = vmatprep.subr.bf16.mxu0 0
        %856 = vmatpush1.bf16.msra.mxu0 0
        %857 = vmatprep.mubr.bf16.mxu0 0
        %858 = vmatmul.mubr.bf16.gmra.mrb[0].mxu0 %v823
        %v859 = vpop.f32.mrb[0].mxu0
        %v860 = vadd.f32 0.0, %v859
        %v861 = vpop.f32.mrb[0].mxu0
        %v862 = vpop.f32.mrb[0].mxu0
        %v863 = vpop.f32.mrb[0].mxu0
        %864 = vdwg.mxu0
        %865 = vrot.lane.b32.xlu0 %v643, 112
        %v866 = vpop.permute.xlu0 %865
        %867 = vrot.lane.b32.xlu0 %v644, 112
        %v868 = vpop.permute.xlu0 %867
        %v870 = vsel %vm647, %v866, 0
        %v873 = vsel %vm647, %v868, 0
        %875 = vmatprep.subr.bf16.mxu0 0
        %876 = vmatpush1.bf16.xpose.msra.mxu0 %v873
        %877 = vmatprep.subr.bf16.mxu0 0
        %878 = vmatpush1.bf16.xpose.msra.mxu0 0
        %879 = vmatprep.subr.bf16.mxu0 0
        %880 = vmatpush1.bf16.xpose.msra.mxu0 0
        %881 = vmatprep.subr.bf16.mxu0 0
        %882 = vmatpush1.bf16.xpose.msra.mxu0 0
        %883 = vmatprep.subr.bf16.mxu0 0
        %884 = vmatpush1.bf16.xpose.msra.mxu0 0
        %885 = vmatprep.subr.bf16.mxu0 0
        %886 = vmatpush1.bf16.xpose.msra.mxu0 0
        %887 = vmatprep.subr.bf16.mxu0 0
        %888 = vmatpush1.bf16.xpose.msra.mxu0 0
        %889 = vmatprep.subr.bf16.mxu0 0
        %890 = vmatpush1.bf16.xpose.msra.mxu0 0
        %891 = vmatprep.subr.bf16.mxu0 0
        %892 = vmatpush1.bf16.xpose.msra.mxu0 0
        %893 = vmatprep.subr.bf16.mxu0 0
        %894 = vmatpush1.bf16.xpose.msra.mxu0 0
        %895 = vmatprep.subr.bf16.mxu0 0
        %896 = vmatpush1.bf16.xpose.msra.mxu0 0
        %897 = vmatprep.subr.bf16.mxu0 0
        %898 = vmatpush1.bf16.xpose.msra.mxu0 0
        %899 = vmatprep.subr.bf16.mxu0 0
        %900 = vmatpush1.bf16.xpose.msra.mxu0 0
        %901 = vmatprep.subr.bf16.mxu0 0
        %902 = vmatpush1.bf16.xpose.msra.mxu0 0
        %903 = vmatprep.subr.bf16.mxu0 0
        %904 = vmatpush1.bf16.xpose.msra.mxu0 0
        %905 = vmatprep.subr.bf16.mxu0 0
        %906 = vmatpush1.bf16.xpose.msra.mxu0 0
        %907 = vmatprep.mubr.bf16.mxu0 0
        %908 = vmatmul.mubr.bf16.gmra.mrb[0].mxu0 %v870
        %v909 = vpop.f32.mrb[0].mxu0
        %v910 = vadd.f32 %v646, %v909
        %v911 = vpop.f32.mrb[0].mxu0
        %v912 = vpop.f32.mrb[0].mxu0
        %v913 = vpop.f32.mrb[0].mxu0
        %914 = vdwg.mxu0
        %v915 = vsel %vm694, %v910, -inf
        %916 = vmax.xlane.f32.xlu0 %v915
        %v917 = vpop.xlane.xlu0 %916
        %v918 = vsub.f32 %v910, %v917
        %v919 = vmul.f32 %v918, 1.442695
        %v920 = vpow.pop %v919
        %v921 = vsel %vm694, %v920, 0.0
        %922 = vadd.xlane.f32.xlu0 %v921
        %v923 = vpop.xlane.xlu0 %922
        %v924 = vrcp.pop %v923
        %v925 = vmul.f32 %v920, %v924
        %v926 = vadd.f32 %v817, %v925
        %v927 = vpack.c.bf16 %v925, %v925
        %928 = vrot.lane.b32.xlu0 %v644, 80
        %v929 = vpop.permute.xlu0 %928
        %v932 = vsel %vm694, %v927, 0
        %934 = vmatprep.subr.bf16.mxu0 0
        %935 = vmatpush1.bf16.msra.mxu0 %v929
        %936 = vmatprep.subr.bf16.mxu0 0
        %937 = vmatpush1.bf16.msra.mxu0 0
        %938 = vmatprep.subr.bf16.mxu0 0
        %939 = vmatpush1.bf16.msra.mxu0 0
        %940 = vmatprep.subr.bf16.mxu0 0
        %941 = vmatpush1.bf16.msra.mxu0 0
        %942 = vmatprep.subr.bf16.mxu0 0
        %943 = vmatpush1.bf16.msra.mxu0 0
        %944 = vmatprep.subr.bf16.mxu0 0
        %945 = vmatpush1.bf16.msra.mxu0 0
        %946 = vmatprep.subr.bf16.mxu0 0
        %947 = vmatpush1.bf16.msra.mxu0 0
        %948 = vmatprep.subr.bf16.mxu0 0
        %949 = vmatpush1.bf16.msra.mxu0 0
        %950 = vmatprep.subr.bf16.mxu0 0
        %951 = vmatpush1.bf16.msra.mxu0 0
        %952 = vmatprep.subr.bf16.mxu0 0
        %953 = vmatpush1.bf16.msra.mxu0 0
        %954 = vmatprep.subr.bf16.mxu0 0
        %955 = vmatpush1.bf16.msra.mxu0 0
        %956 = vmatprep.subr.bf16.mxu0 0
        %957 = vmatpush1.bf16.msra.mxu0 0
        %958 = vmatprep.subr.bf16.mxu0 0
        %959 = vmatpush1.bf16.msra.mxu0 0
        %960 = vmatprep.subr.bf16.mxu0 0
        %961 = vmatpush1.bf16.msra.mxu0 0
        %962 = vmatprep.subr.bf16.mxu0 0
        %963 = vmatpush1.bf16.msra.mxu0 0
        %964 = vmatprep.subr.bf16.mxu0 0
        %965 = vmatpush1.bf16.msra.mxu0 0
        %966 = vmatprep.mubr.bf16.mxu0 0
        %967 = vmatmul.mubr.bf16.gmra.mrb[0].mxu0 %v932
        %v968 = vpop.f32.mrb[0].mxu0
        %v969 = vadd.f32 0.0, %v968
        %v970 = vpop.f32.mrb[0].mxu0
        %v971 = vpop.f32.mrb[0].mxu0
        %v972 = vpop.f32.mrb[0].mxu0
        %973 = vdwg.mxu0
        %974 = vrot.lane.b32.xlu0 %v643, 104
        %v975 = vpop.permute.xlu0 %974
        %976 = vrot.lane.b32.xlu0 %v644, 104
        %v977 = vpop.permute.xlu0 %976
        %v979 = vsel %vm647, %v975, 0
        %v982 = vsel %vm647, %v977, 0
        %984 = vmatprep.subr.bf16.mxu0 0
        %985 = vmatpush1.bf16.xpose.msra.mxu0 %v982
        %986 = vmatprep.subr.bf16.mxu0 0
        %987 = vmatpush1.bf16.xpose.msra.mxu0 0
        %988 = vmatprep.subr.bf16.mxu0 0
        %989 = vmatpush1.bf16.xpose.msra.mxu0 0
        %990 = vmatprep.subr.bf16.mxu0 0
        %991 = vmatpush1.bf16.xpose.msra.mxu0 0
        %992 = vmatprep.subr.bf16.mxu0 0
        %993 = vmatpush1.bf16.xpose.msra.mxu0 0
        %994 = vmatprep.subr.bf16.mxu0 0
        %995 = vmatpush1.bf16.xpose.msra.mxu0 0
        %996 = vmatprep.subr.bf16.mxu0 0
        %997 = vmatpush1.bf16.xpose.msra.mxu0 0
        %998 = vmatprep.subr.bf16.mxu0 0
        %999 = vmatpush1.bf16.xpose.msra.mxu0 0
        %1000 = vmatprep.subr.bf16.mxu0 0
        %1001 = vmatpush1.bf16.xpose.msra.mxu0 0
        %1002 = vmatprep.subr.bf16.mxu0 0
        %1003 = vmatpush1.bf16.xpose.msra.mxu0 0
        %1004 = vmatprep.subr.bf16.mxu0 0
        %1005 = vmatpush1.bf16.xpose.msra.mxu0 0
        %1006 = vmatprep.subr.bf16.mxu0 0
        %1007 = vmatpush1.bf16.xpose.msra.mxu0 0
        %1008 = vmatprep.subr.bf16.mxu0 0
        %1009 = vmatpush1.bf16.xpose.msra.mxu0 0
        %1010 = vmatprep.subr.bf16.mxu0 0
        %1011 = vmatpush1.bf16.xpose.msra.mxu0 0
        %1012 = vmatprep.subr.bf16.mxu0 0
        %1013 = vmatpush1.bf16.xpose.msra.mxu0 0
        %1014 = vmatprep.subr.bf16.mxu0 0
        %1015 = vmatpush1.bf16.xpose.msra.mxu0 0
        %1016 = vmatprep.mubr.bf16.mxu0 0
        %1017 = vmatmul.mubr.bf16.gmra.mrb[0].mxu0 %v979
        %v1018 = vpop.f32.mrb[0].mxu0
        %v1019 = vadd.f32 %v646, %v1018
        %v1020 = vpop.f32.mrb[0].mxu0
        %v1021 = vpop.f32.mrb[0].mxu0
        %v1022 = vpop.f32.mrb[0].mxu0
        %1023 = vdwg.mxu0
        %v1024 = vsel %vm694, %v1019, -inf
        %1025 = vmax.xlane.f32.xlu0 %v1024
        %v1026 = vpop.xlane.xlu0 %1025
        %v1027 = vsub.f32 %v1019, %v1026
        %v1028 = vmul.f32 %v1027, 1.442695
        %v1029 = vpow.pop %v1028
        %v1030 = vsel %vm694, %v1029, 0.0
        %1031 = vadd.xlane.f32.xlu0 %v1030
        %v1032 = vpop.xlane.xlu0 %1031
        %v1033 = vrcp.pop %v1032
        %v1034 = vmul.f32 %v1029, %v1033
        %v1035 = vadd.f32 %v926, %v1034
        %v1036 = vpack.c.bf16 %v1034, %v1034
        %1037 = vrot.lane.b32.xlu0 %v644, 72
        %v1038 = vpop.permute.xlu0 %1037
        %v1041 = vsel %vm694, %v1036, 0
        %1043 = vmatprep.subr.bf16.mxu0 0
        %1044 = vmatpush1.bf16.msra.mxu0 %v1038
        %1045 = vmatprep.subr.bf16.mxu0 0
        %1046 = vmatpush1.bf16.msra.mxu0 0
        %1047 = vmatprep.subr.bf16.mxu0 0
        %1048 = vmatpush1.bf16.msra.mxu0 0
        %1049 = vmatprep.subr.bf16.mxu0 0
        %1050 = vmatpush1.bf16.msra.mxu0 0
        %1051 = vmatprep.subr.bf16.mxu0 0
        %1052 = vmatpush1.bf16.msra.mxu0 0
        %1053 = vmatprep.subr.bf16.mxu0 0
        %1054 = vmatpush1.bf16.msra.mxu0 0
        %1055 = vmatprep.subr.bf16.mxu0 0
        %1056 = vmatpush1.bf16.msra.mxu0 0
        %1057 = vmatprep.subr.bf16.mxu0 0
        %1058 = vmatpush1.bf16.msra.mxu0 0
        %1059 = vmatprep.subr.bf16.mxu0 0
        %1060 = vmatpush1.bf16.msra.mxu0 0
        %1061 = vmatprep.subr.bf16.mxu0 0
        %1062 = vmatpush1.bf16.msra.mxu0 0
        %1063 = vmatprep.subr.bf16.mxu0 0
        %1064 = vmatpush1.bf16.msra.mxu0 0
        %1065 = vmatprep.subr.bf16.mxu0 0
        %1066 = vmatpush1.bf16.msra.mxu0 0
        %1067 = vmatprep.subr.bf16.mxu0 0
        %1068 = vmatpush1.bf16.msra.mxu0 0
        %1069 = vmatprep.subr.bf16.mxu0 0
        %1070 = vmatpush1.bf16.msra.mxu0 0
        %1071 = vmatprep.subr.bf16.mxu0 0
        %1072 = vmatpush1.bf16.msra.mxu0 0
        %1073 = vmatprep.subr.bf16.mxu0 0
        %1074 = vmatpush1.bf16.msra.mxu0 0
        %1075 = vmatprep.mubr.bf16.mxu0 0
        %1076 = vmatmul.mubr.bf16.gmra.mrb[0].mxu0 %v1041
        %v1077 = vpop.f32.mrb[0].mxu0
        %v1078 = vadd.f32 0.0, %v1077
        %v1079 = vpop.f32.mrb[0].mxu0
        %v1080 = vpop.f32.mrb[0].mxu0
        %v1081 = vpop.f32.mrb[0].mxu0
        %1082 = vdwg.mxu0
        %1084 = vrot.lane.b32.xlu0 %v860, 8
        %v1085 = vpop.permute.xlu0 %1084
        %1088 = vrot.lane.b32.xlu0 %v969, 16
        %v1089 = vpop.permute.xlu0 %1088
        %1092 = vrot.lane.b32.xlu0 %v1078, 24
        %v1093 = vpop.permute.xlu0 %1092
        %v1095 = vsel %vm647, %v750, %v1085
        %v1096 = vsel %vm694, %v1095, %v1089
        %vm1097 = vcmask 195584
        %v1098 = vsel %vm1097, %v1096, %v1093
        %v1099 = vpack.c.bf16 %v1098, %v1098
        %v1100 = vld [vmem:[#allocation11] sm:$0xf]
        %v1101 = vld [vmem:[#allocation11 + $0x4] sm:$0xf]
        %v1102 = vld [vmem:[#allocation11 + $0x8] sm:$0xf]
        %v1103 = vld [vmem:[#allocation11 + $0xc] sm:$0xf]
        %v1108 = vunpack.c.l.b16 %v1100
        %v1109 = vunpack.c.l.b16 %v1101
        %v1110 = vunpack.c.l.b16 %v1102
        %v1111 = vunpack.c.l.b16 %v1103
        %v1112 = vpack.c.b16 %v1109, %v1108
        %v1113 = vpack.c.b16 %v1111, %v1110
        %1116 = vrot.lane.b32.xlu0 %v517, 32
        %v1117 = vpop.permute.xlu0 %1116
        %v1120 = vsel %vm531, %v1099, 0
        %1122 = vmatprep.subr.bf16.mxu0 0
        %1123 = vmatpush1.bf16.msra.mxu0 %v1112
        %1124 = vmatprep.subr.bf16.mxu0 0
        %1125 = vmatpush1.bf16.msra.mxu0 %v1113
        %1126 = vmatprep.subr.bf16.mxu0 0
        %1127 = vmatpush1.bf16.msra.mxu0 0
        %1128 = vmatprep.subr.bf16.mxu0 0
        %1129 = vmatpush1.bf16.msra.mxu0 0
        %1130 = vmatprep.subr.bf16.mxu0 0
        %1131 = vmatpush1.bf16.msra.mxu0 0
        %1132 = vmatprep.subr.bf16.mxu0 0
        %1133 = vmatpush1.bf16.msra.mxu0 0
        %1134 = vmatprep.subr.bf16.mxu0 0
        %1135 = vmatpush1.bf16.msra.mxu0 0
        %1136 = vmatprep.subr.bf16.mxu0 0
        %1137 = vmatpush1.bf16.msra.mxu0 0
        %1138 = vmatprep.subr.bf16.mxu0 0
        %1139 = vmatpush1.bf16.msra.mxu0 0
        %1140 = vmatprep.subr.bf16.mxu0 0
        %1141 = vmatpush1.bf16.msra.mxu0 0
        %1142 = vmatprep.subr.bf16.mxu0 0
        %1143 = vmatpush1.bf16.msra.mxu0 0
        %1144 = vmatprep.subr.bf16.mxu0 0
        %1145 = vmatpush1.bf16.msra.mxu0 0
        %1146 = vmatprep.subr.bf16.mxu0 0
        %1147 = vmatpush1.bf16.msra.mxu0 0
        %1148 = vmatprep.subr.bf16.mxu0 0
        %1149 = vmatpush1.bf16.msra.mxu0 0
        %1150 = vmatprep.subr.bf16.mxu0 0
        %1151 = vmatpush1.bf16.msra.mxu0 0
        %1152 = vmatprep.subr.bf16.mxu0 0
        %1153 = vmatpush1.bf16.msra.mxu0 0
        %1154 = vmatprep.mubr.bf16.mxu0 0
        %1155 = vmatmul.mubr.bf16.gmra.mrb[0].mxu0 %v1120
        %v1156 = vpop.f32.mrb[0].mxu0
        %v1157 = vadd.f32 %v1117, %v1156
        %v1158 = vpop.f32.mrb[0].mxu0
        %v1159 = vpop.f32.mrb[0].mxu0
        %v1160 = vpop.f32.mrb[0].mxu0
        %1161 = vdwg.mxu0
        %v1162 = vadd.f32 %v1157, %v504
        %1163 = vst.msk [vmem:[%s491] sm:$0xff] %vm531, %v1162
        %v1164 = vmul.f32 %v1035, 0.25
        %1165 = vst.msk [vmem:[%s498] sm:$0xff] %vm694, %v1164
        %s1166 = sand.u32 %s233, 1
        %s1167 = scalar_lea.sflag [#allocation4], %s1166
        %s1168 = sand.u32 %s233, 1
        %s1169 = smul.addr %s1168, 8
        %s1170 = scalar_lea.vmem [#allocation13], %s1169
        %s1171 = sand.u32 %s259, 1
        %s1172 = scalar_lea.sflag [#allocation15], %s1171
        %s1173 = sand.u32 %s259, 1
        %s1174 = smul.addr %s1173, 8
        %s1175 = scalar_lea.vmem [#allocation14], %s1174
        // Predicated region
        $region77: #{tpu_custom_call.1} parent=51 // pred_check
          %p1176 = pneg %p243
        $region78: #{tpu_custom_call.1} parent=51 // pred_check_branch
          %1178 = sbr.rel (%p1176) target = $region80
        $region79: #{tpu_custom_call.1} parent=51 // pred_region
          %s1180 = ssub.s32 128, 128
          %1181 = vsyncadd %s1167, %s1180
          %s1182 = smul.addr %s37, 128
          %s1183 = scalar_lea.hbm %s8, %s1182
          %s1185 = sshll.u32 %s1170, 4
          %s1186 = int_to_ptr.vmem [resolvable:$true] %s1185
          %1188 = dma.vmem_to_hbm [thread:$0]  %s1186, 128, %s1183, %s1167
        $region80: #{tpu_custom_call.1} parent=51 // pred_fallthru
          _
        // Predicated region
        $region81: #{tpu_custom_call.1} parent=51 // pred_check
          %p1189 = pneg %p269
        $region82: #{tpu_custom_call.1} parent=51 // pred_check_branch
          %1191 = sbr.rel (%p1189) target = $region84
        $region83: #{tpu_custom_call.1} parent=51 // pred_region
          %s1193 = ssub.s32 128, 128
          %1194 = vsyncadd %s1172, %s1193
          %s1195 = smul.addr %s37, 128
          %s1196 = scalar_lea.hbm %s9, %s1195
          %s1198 = sshll.u32 %s1175, 4
          %s1199 = int_to_ptr.vmem [resolvable:$true] %s1198
          %1201 = dma.vmem_to_hbm [thread:$0]  %s1199, 128, %s1196, %s1172
        $region84: #{tpu_custom_call.1} parent=51 // pred_fallthru
          _
      $region52: #{tpu_custom_call.1} parent=5 // pred_fallthru
        _
      %p1202 = scmp.le.s32.totalorder 2, %s32
      // Predicated region
      $region85: #{tpu_custom_call.1} parent=5 // pred_check
        %p1203 = pneg %p1202
      $region86: #{tpu_custom_call.1} parent=5 // pred_check_branch
        %1205 = sbr.rel (%p1203) target = $region88
      $region87: #{tpu_custom_call.1} parent=5 // pred_region
        %s1206 = ssub.s32 %s32, 2
        // Predicated region
        $region89: #{tpu_custom_call.1} parent=87 // pred_check
          %p1207 = pneg %p249
        $region90: #{tpu_custom_call.1} parent=87 // pred_check_branch
          %1209 = sbr.rel (%p1207) target = $region92
        $region91: #{tpu_custom_call.1} parent=87 // pred_region
          %s1210 = sand.u32 %s234, 1
          %s1211 = scalar_lea.sflag [#allocation4], %s1210
          %s1212 = sand.u32 %s234, 1
          %s1213 = smul.addr %s1212, 8
          %s1214 = scalar_lea.vmem [#allocation13], %s1213
          %1215 = dma.done %s1211, 128
        $region92: #{tpu_custom_call.1} parent=87 // pred_fallthru
          _
        // Predicated region
        $region93: #{tpu_custom_call.1} parent=87 // pred_check
          %p1216 = pneg %p275
        $region94: #{tpu_custom_call.1} parent=87 // pred_check_branch
          %1218 = sbr.rel (%p1216) target = $region96
        $region95: #{tpu_custom_call.1} parent=87 // pred_region
          %s1219 = sand.u32 %s260, 1
          %s1220 = scalar_lea.sflag [#allocation15], %s1219
          %s1221 = sand.u32 %s260, 1
          %s1222 = smul.addr %s1221, 8
          %s1223 = scalar_lea.vmem [#allocation14], %s1222
          %1224 = dma.done %s1220, 128
        $region96: #{tpu_custom_call.1} parent=87 // pred_fallthru
          _
      $region88: #{tpu_custom_call.1} parent=5 // pred_fallthru
        _
    $region6: #{tpu_custom_call.1} parent=1 // loop_footer
      %s36 = sadd.s32 1, %s32
    $region7: #{tpu_custom_call.1} parent=1 // loop_footer_branch
      %31 = sbr.rel target = $region3
    $region8: #{tpu_custom_call.1} parent=1 // loop_exit
      _
    %1225 = vsyncpa [#allocation3], 1
    %s1226 = scalar_lea.sflag [#allocation3], 1
    %1227 = vsyncpa %s1226, 1
    %1228 = vsyncpa [#allocation6], 1
    %s1229 = scalar_lea.sflag [#allocation6], 1
    %1230 = vsyncpa %s1229, 1
    %1231 = vsyncpa [#allocation9], 1
    %s1232 = scalar_lea.sflag [#allocation9], 1
    %1233 = vsyncpa %s1232, 1
    %1234 = vsyncpa [#allocation12], 1
    %1235 = vsyncpa [#allocation4], 1
    %s1236 = scalar_lea.sflag [#allocation4], 1
    %1237 = vsyncpa %s1236, 1
    %1238 = vsyncpa [#allocation15], 1
    %s1239 = scalar_lea.sflag [#allocation15], 1
    %1240 = vsyncpa %s1239, 1

</llo_original>
